<compile_context>
chip_gen: v7x
topology: tpu7x:2x2x1
jax: 0.10.0
libtpu: 0.0.40
codegen_flags: <defaults>
</compile_context>

<pallas_src>
import functools
import math

import jax
import jax.numpy as jnp
from jax.experimental import pallas as pl
from jax.experimental.pallas import tpu as pltpu

BN_EPS = 1e-5
MXU_DTYPE = jnp.bfloat16            # MXU operand dtype (accumulation stays f32)
VMEM_LIMIT = 32 * 1024 * 1024       # tile budget chosen for v7x's 64 MiB VMEM


def _largest_divisor_leq(n, cap):
    cap = max(1, min(n, cap))
    for d in range(cap, 0, -1):
        if n % d == 0:
            return d
    return 1


# ----------------------------------------------------------------------------
# Kernel 1: fused (1x1x1 conv + folded BN [+ residual])  ->  (deconv k2 s2 + BN)
# ----------------------------------------------------------------------------
def _pw_deconv_kernel(*refs, tile_d, H, W, F, has_res):
    if has_res:
        x_ref, w1_ref, b1_ref, wd_ref, bd_ref, res_ref, out_ref = refs
    else:
        x_ref, w1_ref, b1_ref, wd_ref, bd_ref, out_ref = refs
        res_ref = None

    Ci = x_ref.shape[-1]
    M = tile_d * H * W

    # lateral 1x1x1 conv; bias from folded BN initialises the result.
    x = x_ref[...].reshape(M, Ci).astype(MXU_DTYPE)
    t = jnp.dot(x, w1_ref[...], preferred_element_type=jnp.float32)
    t = t + b1_ref[...]
    if res_ref is not None:
        t = t + res_ref[...].reshape(M, F)
    t16 = t.astype(MXU_DTYPE)

    bd = bd_ref[...]
    # ConvTranspose3d(k=2, s=2): kW packed into channels (lane-dense 2*F stores),
    # kD/kH are separate output sub-axes (free reshape outside).
    for i in range(2):
        for j in range(2):
            y = jnp.dot(t16, wd_ref[i, j], preferred_element_type=jnp.float32)
            y = y + bd
            out_ref[:, i, :, j, :, :] = (
                y.reshape(tile_d, H, W, 2 * F).astype(out_ref.dtype))


def pw_conv_deconv(x, w1, b1, wd, bd, residual=None, out_dtype=None):
    """x:(N,D,H,W,Ci) NDHWC; w1:(Ci,F) folded; wd:(2,2,F,2F) folded+k-packed.

    Returns the upsampled tensor (N, 2D, 2H, 2W, F)."""
    N, D, H, W, Ci = x.shape
    F = w1.shape[1]
    has_res = residual is not None
    out_dtype = x.dtype if out_dtype is None else out_dtype
    tile_d = _largest_divisor_leq(D, max(1, 2048 // (H * W)))
    ndt = D // tile_d

    x_f = x.reshape(N * D, H, W, Ci)                       # free reshape
    b1r = b1.reshape(1, F).astype(jnp.float32)
    bdr = bd.reshape(1, 2 * F).astype(jnp.float32)

    in_specs = [
        pl.BlockSpec((tile_d, H, W, Ci), lambda n, d: (n * ndt + d, 0, 0, 0)),
        pl.BlockSpec((Ci, F), lambda n, d: (0, 0)),
        pl.BlockSpec((1, F), lambda n, d: (0, 0)),
        pl.BlockSpec((2, 2, F, 2 * F), lambda n, d: (0, 0, 0, 0)),
        pl.BlockSpec((1, 2 * F), lambda n, d: (0, 0)),
    ]
    args = [x_f, w1.astype(MXU_DTYPE), b1r, wd.astype(MXU_DTYPE), bdr]
    if has_res:
        in_specs.append(
            pl.BlockSpec((tile_d, H, W, F), lambda n, d: (n * ndt + d, 0, 0, 0)))
        args.append(residual.reshape(N * D, H, W, F))

    out_spec = pl.BlockSpec((tile_d, 2, H, 2, W, 2 * F),
                            lambda n, d: (n * ndt + d, 0, 0, 0, 0, 0))

    kernel = functools.partial(_pw_deconv_kernel, tile_d=tile_d, H=H, W=W, F=F,
                               has_res=has_res)
    out6 = pl.pallas_call(
        kernel,
        out_shape=jax.ShapeDtypeStruct((N * D, 2, H, 2, W, 2 * F), out_dtype),
        grid_spec=pltpu.PrefetchScalarGridSpec(
            num_scalar_prefetch=0, grid=(N, ndt),
            in_specs=in_specs, out_specs=out_spec),
        compiler_params=pltpu.CompilerParams(
            dimension_semantics=("parallel", "parallel"),
            vmem_limit_bytes=VMEM_LIMIT),
    )(*args)
    # (N*D, 2, H, 2, W, 2F) -> (N, 2D, 2H, 2W, F): contiguous, zero-cost reshape.
    return out6.reshape(N, 2 * D, 2 * H, 2 * W, F)


# ----------------------------------------------------------------------------
# Kernel 2: fused finest level
#   (1x1x1 conv + folded BN) + residual  ->  SAME pad  ->  3x3x3 conv + folded BN
# The intermediate P*_x never leaves VMEM.  Padded inputs live in HBM
# (memory_space=ANY); a (tile_d+2)-deep halo'd slab is DMA'd per grid step.
# ----------------------------------------------------------------------------
def _pw_res_conv3_kernel(c3pad_hbm, uppad_hbm, w1_ref, b1_ref, wk_ref, b3_ref,
                         out_ref, c3s, ups, ps, sem_c, sem_u,
                         *, tile_d, H, W, Ci, F):
    n = pl.program_id(0)
    dt = pl.program_id(1)
    d0 = pl.multiple_of(dt * tile_d, tile_d)
    Dp, Hp, Wp = tile_d + 2, H + 2, W + 2

    # Fetch the halo'd slabs of the (pre-padded, bf16) lateral input and of the
    # upsampled residual for this depth tile.
    cp_c = pltpu.make_async_copy(c3pad_hbm.at[n, pl.ds(d0, Dp)], c3s, sem_c)
    cp_u = pltpu.make_async_copy(uppad_hbm.at[n, pl.ds(d0, Dp)], ups, sem_u)
    cp_c.start()
    cp_u.start()
    # TODO(synk): double-buffer these halo DMAs across depth tiles (2 slots +
    # prefetch of tile dt+1) to hide the remaining fetch latency behind the
    # 27-tap matmuls.

    M2 = Dp * Hp * Wp
    cp_c.wait()
    # Lateral 1x1x1 conv over the whole padded slab (the residual slab DMA is
    # still in flight -> free overlap), bias from folded BN.
    t = jnp.dot(c3s[...].reshape(M2, Ci), w1_ref[...],
                preferred_element_type=jnp.float32) + b1_ref[...]
    cp_u.wait()
    t = t + ups[...].reshape(M2, F).astype(jnp.float32)
    ps[...] = t.reshape(Dp, Hp, Wp, F).astype(ps.dtype)

    # The HBM pads are zero, but the folded-BN bias b1 leaked onto them through
    # the matmul: re-zero the SAME-padding border of the fused intermediate.
    zrow = jnp.zeros((Dp, 1, Wp, F), ps.dtype)
    zcol = jnp.zeros((Dp, Hp, 1, F), ps.dtype)
    ps[:, 0:1, :, :] = zrow
    ps[:, H + 1:H + 2, :, :] = zrow
    ps[:, :, 0:1, :] = zcol
    ps[:, :, W + 1:W + 2, :] = zcol

    zslc = jnp.zeros((1, Hp, Wp, F), ps.dtype)

    @pl.when(dt == 0)
    def _():
        ps[0:1, :, :, :] = zslc           # depth pad below the volume

    @pl.when(dt == pl.num_programs(1) - 1)
    def _():
        ps[tile_d + 1:tile_d + 2, :, :, :] = zslc   # depth pad above the volume

    # 3x3x3 conv + folded BN; bias initialises the accumulator.
    M = tile_d * H * W
    acc = jnp.broadcast_to(b3_ref[...], (M, F)).astype(jnp.float32)
    for kd in range(3):
        for kh in range(3):
            # Fold the 3 kW taps into one (M, 3F) operand -> deeper MXU contraction.
            taps = [ps[pl.ds(kd, tile_d), pl.ds(kh, H), pl.ds(kw, W), :]
                    for kw in range(3)]
            tap = jnp.concatenate(taps, axis=-1).reshape(M, 3 * F)
            acc = acc + jnp.dot(tap, wk_ref[kd, kh],
                                preferred_element_type=jnp.float32)
    out_ref[...] = acc.reshape(1, tile_d, H, W, F).astype(out_ref.dtype)


def pw_conv3_fused(c3, up, w1, b1, wk, b3, out_dtype=jnp.float32):
    """Finest level: conv1x1(c3)+BN + up  ->  3x3x3 conv (SAME) + BN.

    c3:(N,D,H,W,Ci); up:(N,D,H,W,F); w1:(Ci,F) folded; wk:(3,3,3F,F) folded with
    kW packed into the contraction rows."""
    N, D, H, W, Ci = c3.shape
    F = w1.shape[1]
    assert up.shape == (N, D, H, W, F)
    assert wk.shape == (3, 3, 3 * F, F)
    # One SAME pad (+ bf16 cast for MXU/DMA) of the small inputs; the fused
    # intermediate itself never touches HBM.
    c3pad = jnp.pad(c3.astype(MXU_DTYPE),
                    ((0, 0), (1, 1), (1, 1), (1, 1), (0, 0)))
    uppad = jnp.pad(up.astype(MXU_DTYPE),
                    ((0, 0), (1, 1), (1, 1), (1, 1), (0, 0)))
    Hp, Wp = H + 2, W + 2
    tile_d = _largest_divisor_leq(D, max(1, 1024 // (H * W)))
    kernel = functools.partial(_pw_res_conv3_kernel,
                               tile_d=tile_d, H=H, W=W, Ci=Ci, F=F)
    return pl.pallas_call(
        kernel,
        out_shape=jax.ShapeDtypeStruct((N, D, H, W, F), out_dtype),
        grid_spec=pltpu.PrefetchScalarGridSpec(
            num_scalar_prefetch=0, grid=(N, D // tile_d),
            in_specs=[
                pl.BlockSpec(memory_space=pl.ANY),        # padded C3 in HBM
                pl.BlockSpec(memory_space=pl.ANY),        # padded residual in HBM
                pl.BlockSpec((Ci, F), lambda n, d: (0, 0)),
                pl.BlockSpec((1, F), lambda n, d: (0, 0)),
                pl.BlockSpec((3, 3, 3 * F, F), lambda n, d: (0, 0, 0, 0)),
                pl.BlockSpec((1, F), lambda n, d: (0, 0)),
            ],
            out_specs=pl.BlockSpec((1, tile_d, H, W, F),
                                   lambda n, d: (n, d, 0, 0, 0)),
            scratch_shapes=[
                pltpu.VMEM((tile_d + 2, Hp, Wp, Ci), MXU_DTYPE),
                pltpu.VMEM((tile_d + 2, Hp, Wp, F), MXU_DTYPE),
                pltpu.VMEM((tile_d + 2, Hp, Wp, F), MXU_DTYPE),
                pltpu.SemaphoreType.DMA,
                pltpu.SemaphoreType.DMA,
            ]),
        compiler_params=pltpu.CompilerParams(
            dimension_semantics=("parallel", "parallel"),
            vmem_limit_bytes=VMEM_LIMIT),
    )(c3pad, uppad, w1.astype(MXU_DTYPE), b1.reshape(1, F).astype(jnp.float32),
      wk.astype(MXU_DTYPE), b3.reshape(1, F).astype(jnp.float32))


# ----------------------------------------------------------------------------
# Parameters, BN folding, FPN3D wiring
# ----------------------------------------------------------------------------
def fold_bn(bn):
    scale = bn["gamma"] / jnp.sqrt(bn["var"] + BN_EPS)
    bias = bn["beta"] - bn["mean"] * scale
    return scale, bias


def _init_bn(key, c):
    k1, k2, k3, k4 = jax.random.split(key, 4)
    return {
        "gamma": 1.0 + 0.1 * jax.random.normal(k1, (c,), jnp.float32),
        "beta": 0.1 * jax.random.normal(k2, (c,), jnp.float32),
        "mean": 0.1 * jax.random.normal(k3, (c,), jnp.float32),
        "var": 1.0 + 0.1 * jax.random.uniform(k4, (c,), jnp.float32),
    }


def init_fpn3d(key, n_filters, feature_size):
    """n_filters ordered like the PyTorch ctor: channels of (C2,) C3, C4, C5."""
    L = len(n_filters)
    assert L in (3, 4)
    params = {"lateral": [], "deconv": [None] * L}
    for lvl, cin in enumerate(n_filters):
        key, kw, kb = jax.random.split(key, 3)
        params["lateral"].append({
            "w": jax.random.normal(kw, (cin, feature_size), jnp.float32)
                 / math.sqrt(cin),
            "bn": _init_bn(kb, feature_size),
        })
        if lvl >= 1:                       # levels that get upsampled toward lvl-1
            key, kdw, kdb = jax.random.split(key, 3)
            params["deconv"][lvl] = {
                # ConvTranspose3d weight layout (Cin, Cout, kD, kH, kW)
                "w": jax.random.normal(
                    kdw, (feature_size, feature_size, 2, 2, 2), jnp.float32)
                    / math.sqrt(feature_size),
                "bn": _init_bn(kdb, feature_size),
            }
    key, kw3, kb3 = jax.random.split(key, 3)
    params["out_conv"] = {
        # Conv3d k=3 weight in DHWIO layout (kD, kH, kW, Cin, Cout)
        "w": jax.random.normal(kw3, (3, 3, 3, feature_size, feature_size),
                               jnp.float32) / math.sqrt(27 * feature_size),
        "bn": _init_bn(kb3, feature_size),
    }
    return params


def fpn3d_forward(inputs_ncdhw, params):
    """FPN3D.forward.  inputs ordered (C3, C4, C5) or (C2, C3, C4, C5), NCDHW."""
    feats = [jnp.transpose(c, (0, 2, 3, 4, 1)) for c in inputs_ncdhw]  # NDHWC
    L = len(feats)
    F = params["lateral"][0]["w"].shape[1]

    up = None
    for lvl in range(L - 1, 0, -1):           # coarse -> fine (P5 -> P4 -> ...)
        lat, dec = params["lateral"][lvl], params["deconv"][lvl]
        s1, b1 = fold_bn(lat["bn"])
        w1 = lat["w"] * s1[None, :]
        sd, bd = fold_bn(dec["bn"])
        wdp = dec["w"] * sd[None, :, None, None, None]          # (ci,co,i,j,k)
        wdp = jnp.transpose(wdp, (2, 3, 0, 4, 1)).reshape(2, 2, F, 2 * F)
        bdp = jnp.tile(bd, 2)                                   # (k, co) packed
        if up is not None:
            assert up.shape == feats[lvl].shape[:-1] + (F,)
        # The final upsampled map is only ever consumed as a bf16 MXU/VPU operand
        # by the fused finest-level kernel -> emit it in bf16 (halves HBM bytes).
        out_dtype = MXU_DTYPE if lvl == 1 else feats[lvl].dtype
        up = pw_conv_deconv(feats[lvl], w1, b1, wdp, bdp, residual=up,
                            out_dtype=out_dtype)

    lat0 = params["lateral"][0]
    s0, b0 = fold_bn(lat0["bn"])
    oc = params["out_conv"]
    s3, b3 = fold_bn(oc["bn"])
    wk = (oc["w"] * s3[None, None, None, None, :]).reshape(3, 3, 3 * F, F)
    assert up.shape == feats[0].shape[:-1] + (F,)
    out = pw_conv3_fused(feats[0], up, lat0["w"] * s0[None, :], b0, wk, b3,
                         out_dtype=feats[0].dtype)
    return jnp.transpose(out, (0, 4, 1, 2, 3))                  # -> NCDHW


# ----------------------------------------------------------------------------
# Pure-JAX reference (mirrors the kernels' bf16 MXU-operand rounding)
# ----------------------------------------------------------------------------
def _round_mxu(x):
    return x.astype(MXU_DTYPE).astype(jnp.float32)


def fpn3d_ref(inputs_ncdhw, params):
    feats = [jnp.transpose(c, (0, 2, 3, 4, 1)) for c in inputs_ncdhw]
    L = len(feats)
    HI = jax.lax.Precision.HIGHEST

    def lateral(x, p):
        s, b = fold_bn(p["bn"])
        w = _round_mxu(p["w"] * s[None, :])
        return jnp.einsum("ndhwc,cf->ndhwf", _round_mxu(x), w, precision=HI) + b

    def deconv(x, p):
        s, b = fold_bn(p["bn"])
        w = _round_mxu(p["w"] * s[None, :, None, None, None])   # (ci,co,i,j,k)
        N, D, H, W, _ = x.shape
        F = w.shape[1]
        y = jnp.einsum("ndhwc,coijk->ndihjwko", _round_mxu(x), w, precision=HI)
        return y.reshape(N, 2 * D, 2 * H, 2 * W, F) + b

    def conv3(x, p):
        s, b = fold_bn(p["bn"])
        w = _round_mxu(p["w"] * s[None, None, None, None, :])
        y = jax.lax.conv_general_dilated(
            _round_mxu(x), w, (1, 1, 1), "SAME",
            dimension_numbers=("NDHWC", "DHWIO", "NDHWC"), precision=HI)
        return y + b

    up = None
    for lvl in range(L - 1, 0, -1):
        x = lateral(feats[lvl], params["lateral"][lvl])
        if up is not None:
            x = x + up
        up = deconv(x, params["deconv"][lvl])
    # The kernel emits the final upsampled map in bf16 -> mirror that rounding.
    p = lateral(feats[0], params["lateral"][0]) + _round_mxu(up)
    out = conv3(p, params["out_conv"])
    return jnp.transpose(out, (0, 4, 1, 2, 3))


if __name__ == "__main__":
    key = jax.random.PRNGKey(0)
    N = 2
    feature_size = 128                 # lane-dense channels (full 128-lane vregs)
    n_filters = (32, 64, 128)          # channels of (C3, C4, C5)
    spatial = ((16, 16, 16), (8, 8, 8), (4, 4, 4))

    inputs = []
    for cin, (d, h, w) in zip(n_filters, spatial):
        key, kx = jax.random.split(key)
        inputs.append(jax.random.normal(kx, (N, cin, d, h, w), jnp.float32))

    key, kp = jax.random.split(key)
    params = init_fpn3d(kp, n_filters, feature_size)

    out = jax.block_until_ready(fpn3d_forward(inputs, params))
    assert out.shape == (N, feature_size, 16, 16, 16), out.shape

    ref = fpn3d_ref(inputs, params)
    err = float(jnp.max(jnp.abs(out - ref)))
    assert jnp.allclose(out, ref, atol=1e-2, rtol=1e-2), err

    print("KERNEL_OK")
</pallas_src>

<mosaic_0001>
module attributes {stable_mosaic.version = 11 : i64} {
  func.func @_pw_deconv_kernel(%arg0: i32, %arg1: i32, %arg2: memref<4x4x4x128xf32, #tpu.memory_space<vmem>>, %arg3: memref<128x128xbf16, #tpu.memory_space<vmem>>, %arg4: memref<1x128xf32, #tpu.memory_space<vmem>>, %arg5: memref<2x2x128x256xbf16, #tpu.memory_space<vmem>>, %arg6: memref<1x256xf32, #tpu.memory_space<vmem>>, %arg7: memref<4x2x4x2x4x256xf32, #tpu.memory_space<vmem>>) attributes {dimension_semantics = [#tpu.dimension_semantics<parallel>, #tpu.dimension_semantics<parallel>], iteration_bounds = array<i64: 2, 1>, scalar_prefetch = 0 : i64, scratch_operands = 0 : i64, tpu.core_type = #tpu.core_type<tc>, window_params = [{transform_indices = @transform_0, window_bounds = array<i64: 4, 4, 4, 128>}, {pipeline_mode = #tpu.pipeline_mode<synchronous>, transform_indices = @transform_1, window_bounds = array<i64: 128, 128>}, {pipeline_mode = #tpu.pipeline_mode<synchronous>, transform_indices = @transform_2, window_bounds = array<i64: 1, 128>}, {pipeline_mode = #tpu.pipeline_mode<synchronous>, transform_indices = @transform_3, window_bounds = array<i64: 2, 2, 128, 256>}, {pipeline_mode = #tpu.pipeline_mode<synchronous>, transform_indices = @transform_4, window_bounds = array<i64: 1, 256>}, {transform_indices = @transform_5, window_bounds = array<i64: 4, 2, 4, 2, 4, 256>}]} {
    %c0 = arith.constant 0 : index
    %c0_0 = arith.constant 0 : index
    %c0_1 = arith.constant 0 : index
    %c0_2 = arith.constant 0 : index
    %0 = vector.load %arg2[%c0, %c0_0, %c0_1, %c0_2] : memref<4x4x4x128xf32, #tpu.memory_space<vmem>>, vector<4x4x4x128xf32>
    %1 = vector.shape_cast %0 : vector<4x4x4x128xf32> to vector<64x128xf32>
    %2 = arith.truncf %1 : vector<64x128xf32> to vector<64x128xbf16>
    %c0_3 = arith.constant 0 : index
    %c0_4 = arith.constant 0 : index
    %3 = vector.load %arg3[%c0_3, %c0_4] : memref<128x128xbf16, #tpu.memory_space<vmem>>, vector<128x128xbf16>
    %cst = arith.constant dense<0.000000e+00> : vector<64x128xf32>
    %4 = tpu.matmul %2, %3, %cst {dimension_numbers = #tpu.dot_dimension_numbers<[1], [0], [0], [1], [0, 0, 1, 1], [], []>} : vector<64x128xbf16>, vector<128x128xbf16>, vector<64x128xf32> -> vector<64x128xf32>
    %c0_5 = arith.constant 0 : index
    %c0_6 = arith.constant 0 : index
    %5 = vector.load %arg4[%c0_5, %c0_6] : memref<1x128xf32, #tpu.memory_space<vmem>>, vector<1x128xf32>
    %6 = vector.broadcast %5 : vector<1x128xf32> to vector<64x128xf32>
    %7 = arith.addf %4, %6 : vector<64x128xf32>
    %8 = arith.truncf %7 : vector<64x128xf32> to vector<64x128xbf16>
    %c0_7 = arith.constant 0 : index
    %c0_8 = arith.constant 0 : index
    %9 = vector.load %arg6[%c0_7, %c0_8] : memref<1x256xf32, #tpu.memory_space<vmem>>, vector<1x256xf32>
    %c0_9 = arith.constant 0 : index
    %c0_10 = arith.constant 0 : index
    %c0_11 = arith.constant 0 : index
    %c0_12 = arith.constant 0 : index
    %10 = vector.load %arg5[%c0_9, %c0_10, %c0_11, %c0_12] : memref<2x2x128x256xbf16, #tpu.memory_space<vmem>>, vector<1x1x128x256xbf16>
    %11 = vector.shape_cast %10 : vector<1x1x128x256xbf16> to vector<128x256xbf16>
    %cst_13 = arith.constant dense<0.000000e+00> : vector<64x256xf32>
    %12 = tpu.matmul %8, %11, %cst_13 {dimension_numbers = #tpu.dot_dimension_numbers<[1], [0], [0], [1], [0, 0, 1, 1], [], []>} : vector<64x128xbf16>, vector<128x256xbf16>, vector<64x256xf32> -> vector<64x256xf32>
    %13 = vector.broadcast %9 : vector<1x256xf32> to vector<64x256xf32>
    %14 = arith.addf %12, %13 : vector<64x256xf32>
    %15 = vector.shape_cast %14 : vector<64x256xf32> to vector<4x4x4x256xf32>
    %c0_14 = arith.constant 0 : index
    %c0_15 = arith.constant 0 : index
    %c0_16 = arith.constant 0 : index
    %c0_17 = arith.constant 0 : index
    %c0_18 = arith.constant 0 : index
    %c0_19 = arith.constant 0 : index
    %16 = vector.load %arg7[%c0_14, %c0_15, %c0_16, %c0_17, %c0_18, %c0_19] : memref<4x2x4x2x4x256xf32, #tpu.memory_space<vmem>>, vector<4x1x4x1x4x256xf32>
    %17 = vector.shape_cast %16 : vector<4x1x4x1x4x256xf32> to vector<4x4x4x256xf32>
    %18 = vector.shape_cast %15 : vector<4x4x4x256xf32> to vector<4x1x4x1x4x256xf32>
    tpu.vector_store %arg7[%c0_14, %c0_15, %c0_16, %c0_17, %c0_18, %c0_19], %18 {strides = array<i32>} : memref<4x2x4x2x4x256xf32, #tpu.memory_space<vmem>>, vector<4x1x4x1x4x256xf32>,
    %c0_20 = arith.constant 0 : index
    %c1 = arith.constant 1 : index
    %c0_21 = arith.constant 0 : index
    %c0_22 = arith.constant 0 : index
    %19 = vector.load %arg5[%c0_20, %c1, %c0_21, %c0_22] : memref<2x2x128x256xbf16, #tpu.memory_space<vmem>>, vector<1x1x128x256xbf16>
    %20 = vector.shape_cast %19 : vector<1x1x128x256xbf16> to vector<128x256xbf16>
    %cst_23 = arith.constant dense<0.000000e+00> : vector<64x256xf32>
    %21 = tpu.matmul %8, %20, %cst_23 {dimension_numbers = #tpu.dot_dimension_numbers<[1], [0], [0], [1], [0, 0, 1, 1], [], []>} : vector<64x128xbf16>, vector<128x256xbf16>, vector<64x256xf32> -> vector<64x256xf32>
    %22 = vector.broadcast %9 : vector<1x256xf32> to vector<64x256xf32>
    %23 = arith.addf %21, %22 : vector<64x256xf32>
    %24 = vector.shape_cast %23 : vector<64x256xf32> to vector<4x4x4x256xf32>
    %c0_24 = arith.constant 0 : index
    %c0_25 = arith.constant 0 : index
    %c0_26 = arith.constant 0 : index
    %c1_27 = arith.constant 1 : index
    %c0_28 = arith.constant 0 : index
    %c0_29 = arith.constant 0 : index
    %25 = vector.load %arg7[%c0_24, %c0_25, %c0_26, %c1_27, %c0_28, %c0_29] : memref<4x2x4x2x4x256xf32, #tpu.memory_space<vmem>>, vector<4x1x4x1x4x256xf32>
    %26 = vector.shape_cast %25 : vector<4x1x4x1x4x256xf32> to vector<4x4x4x256xf32>
    %27 = vector.shape_cast %24 : vector<4x4x4x256xf32> to vector<4x1x4x1x4x256xf32>
    tpu.vector_store %arg7[%c0_24, %c0_25, %c0_26, %c1_27, %c0_28, %c0_29], %27 {strides = array<i32>} : memref<4x2x4x2x4x256xf32, #tpu.memory_space<vmem>>, vector<4x1x4x1x4x256xf32>,
    %c1_30 = arith.constant 1 : index
    %c0_31 = arith.constant 0 : index
    %c0_32 = arith.constant 0 : index
    %c0_33 = arith.constant 0 : index
    %28 = vector.load %arg5[%c1_30, %c0_31, %c0_32, %c0_33] : memref<2x2x128x256xbf16, #tpu.memory_space<vmem>>, vector<1x1x128x256xbf16>
    %29 = vector.shape_cast %28 : vector<1x1x128x256xbf16> to vector<128x256xbf16>
    %cst_34 = arith.constant dense<0.000000e+00> : vector<64x256xf32>
    %30 = tpu.matmul %8, %29, %cst_34 {dimension_numbers = #tpu.dot_dimension_numbers<[1], [0], [0], [1], [0, 0, 1, 1], [], []>} : vector<64x128xbf16>, vector<128x256xbf16>, vector<64x256xf32> -> vector<64x256xf32>
    %31 = vector.broadcast %9 : vector<1x256xf32> to vector<64x256xf32>
    %32 = arith.addf %30, %31 : vector<64x256xf32>
    %33 = vector.shape_cast %32 : vector<64x256xf32> to vector<4x4x4x256xf32>
    %c0_35 = arith.constant 0 : index
    %c1_36 = arith.constant 1 : index
    %c0_37 = arith.constant 0 : index
    %c0_38 = arith.constant 0 : index
    %c0_39 = arith.constant 0 : index
    %c0_40 = arith.constant 0 : index
    %34 = vector.load %arg7[%c0_35, %c1_36, %c0_37, %c0_38, %c0_39, %c0_40] : memref<4x2x4x2x4x256xf32, #tpu.memory_space<vmem>>, vector<4x1x4x1x4x256xf32>
    %35 = vector.shape_cast %34 : vector<4x1x4x1x4x256xf32> to vector<4x4x4x256xf32>
    %36 = vector.shape_cast %33 : vector<4x4x4x256xf32> to vector<4x1x4x1x4x256xf32>
    tpu.vector_store %arg7[%c0_35, %c1_36, %c0_37, %c0_38, %c0_39, %c0_40], %36 {strides = array<i32>} : memref<4x2x4x2x4x256xf32, #tpu.memory_space<vmem>>, vector<4x1x4x1x4x256xf32>,
    %c1_41 = arith.constant 1 : index
    %c1_42 = arith.constant 1 : index
    %c0_43 = arith.constant 0 : index
    %c0_44 = arith.constant 0 : index
    %37 = vector.load %arg5[%c1_41, %c1_42, %c0_43, %c0_44] : memref<2x2x128x256xbf16, #tpu.memory_space<vmem>>, vector<1x1x128x256xbf16>
    %38 = vector.shape_cast %37 : vector<1x1x128x256xbf16> to vector<128x256xbf16>
    %cst_45 = arith.constant dense<0.000000e+00> : vector<64x256xf32>
    %39 = tpu.matmul %8, %38, %cst_45 {dimension_numbers = #tpu.dot_dimension_numbers<[1], [0], [0], [1], [0, 0, 1, 1], [], []>} : vector<64x128xbf16>, vector<128x256xbf16>, vector<64x256xf32> -> vector<64x256xf32>
    %40 = vector.broadcast %9 : vector<1x256xf32> to vector<64x256xf32>
    %41 = arith.addf %39, %40 : vector<64x256xf32>
    %42 = vector.shape_cast %41 : vector<64x256xf32> to vector<4x4x4x256xf32>
    %c0_46 = arith.constant 0 : index
    %c1_47 = arith.constant 1 : index
    %c0_48 = arith.constant 0 : index
    %c1_49 = arith.constant 1 : index
    %c0_50 = arith.constant 0 : index
    %c0_51 = arith.constant 0 : index
    %43 = vector.load %arg7[%c0_46, %c1_47, %c0_48, %c1_49, %c0_50, %c0_51] : memref<4x2x4x2x4x256xf32, #tpu.memory_space<vmem>>, vector<4x1x4x1x4x256xf32>
    %44 = vector.shape_cast %43 : vector<4x1x4x1x4x256xf32> to vector<4x4x4x256xf32>
    %45 = vector.shape_cast %42 : vector<4x4x4x256xf32> to vector<4x1x4x1x4x256xf32>
    tpu.vector_store %arg7[%c0_46, %c1_47, %c0_48, %c1_49, %c0_50, %c0_51], %45 {strides = array<i32>} : memref<4x2x4x2x4x256xf32, #tpu.memory_space<vmem>>, vector<4x1x4x1x4x256xf32>,
    return
  }
  func.func @transform_0(%arg0: i32, %arg1: i32) -> (i32, i32, i32, i32) {
    %c1_i32 = arith.constant 1 : i32
    %0 = arith.muli %arg0, %c1_i32 : i32
    %1 = arith.addi %0, %arg1 : i32
    %c0_i32 = arith.constant 0 : i32
    %c0_i32_0 = arith.constant 0 : i32
    %c0_i32_1 = arith.constant 0 : i32
    %c0_i32_2 = arith.constant 0 : i32
    return %1, %c0_i32, %c0_i32_0, %c0_i32_1 : i32, i32, i32, i32
  }
  func.func @transform_1(%arg0: i32, %arg1: i32) -> (i32, i32) {
    %c0_i32 = arith.constant 0 : i32
    %c0_i32_0 = arith.constant 0 : i32
    %c0_i32_1 = arith.constant 0 : i32
    return %c0_i32, %c0_i32_0 : i32, i32
  }
  func.func @transform_2(%arg0: i32, %arg1: i32) -> (i32, i32) {
    %c0_i32 = arith.constant 0 : i32
    %c0_i32_0 = arith.constant 0 : i32
    %c0_i32_1 = arith.constant 0 : i32
    return %c0_i32, %c0_i32_0 : i32, i32
  }
  func.func @transform_3(%arg0: i32, %arg1: i32) -> (i32, i32, i32, i32) {
    %c0_i32 = arith.constant 0 : i32
    %c0_i32_0 = arith.constant 0 : i32
    %c0_i32_1 = arith.constant 0 : i32
    %c0_i32_2 = arith.constant 0 : i32
    %c0_i32_3 = arith.constant 0 : i32
    return %c0_i32, %c0_i32_0, %c0_i32_1, %c0_i32_2 : i32, i32, i32, i32
  }
  func.func @transform_4(%arg0: i32, %arg1: i32) -> (i32, i32) {
    %c0_i32 = arith.constant 0 : i32
    %c0_i32_0 = arith.constant 0 : i32
    %c0_i32_1 = arith.constant 0 : i32
    return %c0_i32, %c0_i32_0 : i32, i32
  }
  func.func @transform_5(%arg0: i32, %arg1: i32) -> (i32, i32, i32, i32, i32, i32) {
    %c1_i32 = arith.constant 1 : i32
    %0 = arith.muli %arg0, %c1_i32 : i32
    %1 = arith.addi %0, %arg1 : i32
    %c0_i32 = arith.constant 0 : i32
    %c0_i32_0 = arith.constant 0 : i32
    %c0_i32_1 = arith.constant 0 : i32
    %c0_i32_2 = arith.constant 0 : i32
    %c0_i32_3 = arith.constant 0 : i32
    %c0_i32_4 = arith.constant 0 : i32
    return %1, %c0_i32, %c0_i32_0, %c0_i32_1, %c0_i32_2, %c0_i32_3 : i32, i32, i32, i32, i32, i32
  }
}

</mosaic_0001>

<llo_original>
// kernel: tpu_custom_call.1
$region0: #{tpu_custom_call.1}
  #allocation0 [shape = 'u32[]', space=smem, size = 0x4, offset = 0x4, fixed_abs, tag = 'smem constant byte address 0x4 - core index']
  #allocation1 [shape = 'u32[144,128]{1,0:T(1,128)}', space=vmem, size = 0x12000, scoped, tag = 'internal scratch']
  %s0 = inlined_call_operand.hbm [shape: f32[8,4,4,128], index: 0, kind: input, shape index: {}]
  %s1 = inlined_call_operand.hbm [shape: bf16[128,128], index: 1, kind: input, shape index: {}]
  %s2 = inlined_call_operand.vmem [shape: f32[1,128], index: 2, kind: input, shape index: {}]
  %s3 = inlined_call_operand.hbm [shape: bf16[2,2,128,256], index: 3, kind: input, shape index: {}]
  %s4 = inlined_call_operand.vmem [shape: f32[1,256], index: 4, kind: input, shape index: {}]
  %s5 = inlined_call_operand.hbm [shape: f32[8,2,4,2,4,256], index: 5, kind: output, shape index: {}]
  %s6 = sld [smem:[#allocation0]]
  $region65: #{tpu_custom_call.1} parent=0
    _
  %s8 = ssub.s32 1, %s6
  %s9 = scalar_select 0, %s8, %s6
  $region1: #{tpu_custom_call.1} parent=0
    #allocation2 [shape = 'u8[65536]{0}', space=vmem, size = 0x10000, scoped, tag = 'input window, operand 0']
    #allocation3 [shape = 's32[2]{0}', space=sflag, size = 0x8, scoped, tag = 'scoped memory for tpu_custom_call.1']
    #allocation4 [shape = 's32[2]{0}', space=sflag, size = 0x8, scoped, tag = 'scoped memory for tpu_custom_call.1']
    #allocation5 [shape = 'u8[32768]{0}', space=vmem, size = 0x8000, scoped, tag = 'input window, operand 1, single buffered']
    #allocation6 [shape = 's32[1]{0}', space=sflag, size = 0x4, scoped, tag = 'scoped memory for tpu_custom_call.1']
    #allocation7 [shape = 'u8[262144]{0}', space=vmem, size = 0x40000, scoped, tag = 'input window, operand 3, single buffered']
    #allocation8 [shape = 'u8[524288]{0}', space=vmem, size = 0x80000, scoped, tag = 'output window, operand 0']
    %10 = vsyncpa [#allocation3], 0
    %s11 = scalar_lea.sflag [#allocation3], 1
    %12 = vsyncpa %s11, 0
    %13 = vsyncpa [#allocation6], 0
    %14 = vsyncpa [#allocation4], 0
    %s15 = scalar_lea.sflag [#allocation4], 1
    %16 = vsyncpa %s15, 0
    loop: start=0, step=1, limit=4
    $region2: #{tpu_custom_call.1} parent=1 // loop_pre_header
      _
    $region3: #{tpu_custom_call.1} parent=1 // loop_header
      %s18 = sphi 0, %s22
      %p19 = scmp.ge.s32.totalorder %s18, 4
      %s25 = sphi 0, %s37
      %s26 = sphi 0, %s33
      %s27 = sphi 0, %s25
      %s28 = sphi 0, %s26
      %s29 = sphi 0, %s27
      %s30 = sphi 0, %s28
      %s42 = sphi 0, %s44
      %s45 = sphi 0, %s42
      %s46 = sphi 0, %s45
      %s62 = sphi 0, %s46
      %s66 = sphi 0, %s66
      %s68 = sphi 0, %s66
      %s69 = sphi 0, %s68
      %s83 = sphi 0, %s69
      %s87 = sphi 0, %s87
      %s89 = sphi 0, %s87
      %s90 = sphi 0, %s89
      %s104 = sphi 0, %s90
      %s108 = sphi 0, %s108
      %s110 = sphi 0, %s108
      %s111 = sphi 0, %s110
      %s125 = sphi 0, %s111
      %s129 = sphi 0, %s129
      %s131 = sphi 0, %s129
      %s132 = sphi 0, %s131
      %s146 = sphi 0, %s132
      %s154 = sphi 0, %s156
      %s157 = sphi 0, %s154
      %s158 = sphi 0, %s157
      %s174 = sphi 0, %s158
    $region4: #{tpu_custom_call.1} parent=1 // loop_header_branch
      %21 = sbr.rel (%p19) target = $region8
    $region5: #{tpu_custom_call.1} parent=1 // loop_body
      %s23 = ssub.s32 %s18, 1
      %s24 = ssub.s32 %s18, 2
      %s31 = sadd.s32 1, %s26
      %p32 = scmp.ge.s32.totalorder %s31, 1
      %s33 = scalar_select %p32, 0, %s31
      %s34 = sadd.s32 1, %s25
      %s35 = scalar_select %p32, %s34, %s25
      %p36 = scmp.ge.s32.totalorder %s35, 2
      %s37 = scalar_select %p36, 0, %s35
      %s38 = sadd.s32 %s25, %s26
      %s39 = sadd.s32 %s37, %s33
      %s40 = ssub.s32 %s38, %s39
      %p41 = scmp.eq.s32.totalorder %s40, 0
      %s43 = sadd.s32 %s42, 1
      %s44 = scalar_select %p41, %s42, %s43
      %p47 = pneg %p41
      %p48 = scmp.eq.s32.totalorder %s18, 1
      %p49 = por %p47, %p48
      %p50 = scmp.ne.s32.totalorder %s42, %s45
      %p51 = scmp.eq.s32.totalorder %s18, 0
      %p52 = por %p50, %p51
      %p53 = scmp.ne.s32.totalorder %s42, %s45
      %p54 = scmp.eq.s32.totalorder %s23, 1
      %p55 = por %p53, %p54
      %p56 = scmp.ne.s32.totalorder %s45, %s46
      %p57 = scmp.eq.s32.totalorder %s23, 0
      %p58 = por %p56, %p57
      %p59 = scmp.ne.s32.totalorder %s45, %s46
      %p60 = scmp.eq.s32.totalorder %s24, 1
      %p61 = por %p59, %p60
      %p63 = scmp.ne.s32.totalorder %s46, %s62
      %p64 = scmp.eq.s32.totalorder %s24, 0
      %p65 = por %p63, %p64
      %s67 = sadd.s32 %s66, 1
      %p70 = scmp.eq.s32.totalorder %s18, 1
      %p71 = scmp.ne.s32.totalorder %s66, %s68
      %p72 = scmp.eq.s32.totalorder %s18, 0
      %p73 = por %p71, %p72
      %p74 = scmp.ne.s32.totalorder %s66, %s68
      %p75 = scmp.eq.s32.totalorder %s23, 1
      %p76 = por %p74, %p75
      %p77 = scmp.ne.s32.totalorder %s68, %s69
      %p78 = scmp.eq.s32.totalorder %s23, 0
      %p79 = por %p77, %p78
      %p80 = scmp.ne.s32.totalorder %s68, %s69
      %p81 = scmp.eq.s32.totalorder %s24, 1
      %p82 = por %p80, %p81
      %p84 = scmp.ne.s32.totalorder %s69, %s83
      %p85 = scmp.eq.s32.totalorder %s24, 0
      %p86 = por %p84, %p85
      %s88 = sadd.s32 %s87, 1
      %p91 = scmp.eq.s32.totalorder %s18, 1
      %p92 = scmp.ne.s32.totalorder %s87, %s89
      %p93 = scmp.eq.s32.totalorder %s18, 0
      %p94 = por %p92, %p93
      %p95 = scmp.ne.s32.totalorder %s87, %s89
      %p96 = scmp.eq.s32.totalorder %s23, 1
      %p97 = por %p95, %p96
      %p98 = scmp.ne.s32.totalorder %s89, %s90
      %p99 = scmp.eq.s32.totalorder %s23, 0
      %p100 = por %p98, %p99
      %p101 = scmp.ne.s32.totalorder %s89, %s90
      %p102 = scmp.eq.s32.totalorder %s24, 1
      %p103 = por %p101, %p102
      %p105 = scmp.ne.s32.totalorder %s90, %s104
      %p106 = scmp.eq.s32.totalorder %s24, 0
      %p107 = por %p105, %p106
      %s109 = sadd.s32 %s108, 1
      %p112 = scmp.eq.s32.totalorder %s18, 1
      %p113 = scmp.ne.s32.totalorder %s108, %s110
      %p114 = scmp.eq.s32.totalorder %s18, 0
      %p115 = por %p113, %p114
      %p116 = scmp.ne.s32.totalorder %s108, %s110
      %p117 = scmp.eq.s32.totalorder %s23, 1
      %p118 = por %p116, %p117
      %p119 = scmp.ne.s32.totalorder %s110, %s111
      %p120 = scmp.eq.s32.totalorder %s23, 0
      %p121 = por %p119, %p120
      %p122 = scmp.ne.s32.totalorder %s110, %s111
      %p123 = scmp.eq.s32.totalorder %s24, 1
      %p124 = por %p122, %p123
      %p126 = scmp.ne.s32.totalorder %s111, %s125
      %p127 = scmp.eq.s32.totalorder %s24, 0
      %p128 = por %p126, %p127
      %s130 = sadd.s32 %s129, 1
      %p133 = scmp.eq.s32.totalorder %s18, 1
      %p134 = scmp.ne.s32.totalorder %s129, %s131
      %p135 = scmp.eq.s32.totalorder %s18, 0
      %p136 = por %p134, %p135
      %p137 = scmp.ne.s32.totalorder %s129, %s131
      %p138 = scmp.eq.s32.totalorder %s23, 1
      %p139 = por %p137, %p138
      %p140 = scmp.ne.s32.totalorder %s131, %s132
      %p141 = scmp.eq.s32.totalorder %s23, 0
      %p142 = por %p140, %p141
      %p143 = scmp.ne.s32.totalorder %s131, %s132
      %p144 = scmp.eq.s32.totalorder %s24, 1
      %p145 = por %p143, %p144
      %p147 = scmp.ne.s32.totalorder %s132, %s146
      %p148 = scmp.eq.s32.totalorder %s24, 0
      %p149 = por %p147, %p148
      %s150 = sadd.s32 %s25, %s26
      %s151 = sadd.s32 %s37, %s33
      %s152 = ssub.s32 %s150, %s151
      %p153 = scmp.eq.s32.totalorder %s152, 0
      %s155 = sadd.s32 %s154, 1
      %s156 = scalar_select %p153, %s154, %s155
      %p159 = pneg %p153
      %p160 = scmp.eq.s32.totalorder %s18, 1
      %p161 = por %p159, %p160
      %p162 = scmp.ne.s32.totalorder %s154, %s157
      %p163 = scmp.eq.s32.totalorder %s18, 0
      %p164 = por %p162, %p163
      %p165 = scmp.ne.s32.totalorder %s154, %s157
      %p166 = scmp.eq.s32.totalorder %s23, 1
      %p167 = por %p165, %p166
      %p168 = scmp.ne.s32.totalorder %s157, %s158
      %p169 = scmp.eq.s32.totalorder %s23, 0
      %p170 = por %p168, %p169
      %p171 = scmp.ne.s32.totalorder %s157, %s158
      %p172 = scmp.eq.s32.totalorder %s24, 1
      %p173 = por %p171, %p172
      %p175 = scmp.ne.s32.totalorder %s158, %s174
      %p176 = scmp.eq.s32.totalorder %s24, 0
      %p177 = por %p175, %p176
      %p178 = scmp.le.s32.totalorder 1, %s18
      %p179 = scmp.lt.s32.totalorder %s18, 3
      %p180 = pnand %p178, %p179
      %p181 = pneg %p180
      // Predicated region
      $region9: #{tpu_custom_call.1} parent=5 // pred_check
        _
      $region10: #{tpu_custom_call.1} parent=5 // pred_check_branch
        %183 = sbr.rel (%p180) target = $region12
      $region11: #{tpu_custom_call.1} parent=5 // pred_region
        %s184 = ssub.s32 %s18, 1
        // Predicated region
        $region13: #{tpu_custom_call.1} parent=11 // pred_check
          %p185 = pneg %p79
        $region14: #{tpu_custom_call.1} parent=11 // pred_check_branch
          %187 = sbr.rel (%p185) target = $region16
        $region15: #{tpu_custom_call.1} parent=11 // pred_region
          %s189 = ssub.s32 1024, 1024
          %190 = vsyncadd [#allocation6], %s189
          %s191 = sshll.u32 [#allocation5], 4
          %s192 = int_to_ptr.vmem [resolvable:$true] %s191
          %197 = dma.hbm_to_vmem [thread:$0]  %s1, 1024, %s192, [#allocation6], 64, 64, 4
        $region16: #{tpu_custom_call.1} parent=11 // pred_fallthru
          _
        // Predicated region
        $region17: #{tpu_custom_call.1} parent=11 // pred_check
          %p198 = pneg %p100
        $region18: #{tpu_custom_call.1} parent=11 // pred_check_branch
          %200 = sbr.rel (%p198) target = $region20
        $region19: #{tpu_custom_call.1} parent=11 // pred_region
          _
        $region20: #{tpu_custom_call.1} parent=11 // pred_fallthru
          _
        // Predicated region
        $region21: #{tpu_custom_call.1} parent=11 // pred_check
          %p201 = pneg %p121
        $region22: #{tpu_custom_call.1} parent=11 // pred_check_branch
          %203 = sbr.rel (%p201) target = $region24
        $region23: #{tpu_custom_call.1} parent=11 // pred_region
          %s205 = ssub.s32 8192, 8192
          %206 = vsyncadd [#allocation6], %s205
          %s207 = sshll.u32 [#allocation7], 4
          %s208 = int_to_ptr.vmem [resolvable:$true] %s207
          %213 = dma.hbm_to_vmem [thread:$0]  %s3, 8192, %s208, [#allocation6], 128, 128, 8
        $region24: #{tpu_custom_call.1} parent=11 // pred_fallthru
          _
        // Predicated region
        $region25: #{tpu_custom_call.1} parent=11 // pred_check
          %p214 = pneg %p142
        $region26: #{tpu_custom_call.1} parent=11 // pred_check_branch
          %216 = sbr.rel (%p214) target = $region28
        $region27: #{tpu_custom_call.1} parent=11 // pred_region
          _
        $region28: #{tpu_custom_call.1} parent=11 // pred_fallthru
          _
      $region12: #{tpu_custom_call.1} parent=5 // pred_fallthru
        _
      %p217 = scmp.lt.s32.totalorder %s18, 2
      // Predicated region
      $region29: #{tpu_custom_call.1} parent=5 // pred_check
        %p218 = pneg %p217
      $region30: #{tpu_custom_call.1} parent=5 // pred_check_branch
        %220 = sbr.rel (%p218) target = $region32
      $region31: #{tpu_custom_call.1} parent=5 // pred_region
        // Predicated region
        $region33: #{tpu_custom_call.1} parent=31 // pred_check
          %p221 = pneg %p52
        $region34: #{tpu_custom_call.1} parent=31 // pred_check_branch
          %223 = sbr.rel (%p221) target = $region36
        $region35: #{tpu_custom_call.1} parent=31 // pred_region
          %s224 = sand.u32 %s42, 1
          %s225 = scalar_lea.sflag [#allocation3], %s224
          %s226 = sand.u32 %s42, 1
          %s227 = smul.addr %s226, 64
          %s228 = scalar_lea.vmem [#allocation2], %s227
          %s229 = sadd.s32 %s25, %s26
          %s230 = smul.u32 4, %s229
          %s232 = ssub.s32 1024, 1024
          %233 = vsyncadd %s225, %s232
          %s234 = smul.addr %s230, 4
          %s235 = smul.addr %s234, 64
          %s236 = scalar_lea.hbm %s0, %s235
          %s237 = sshll.u32 %s228, 4
          %s238 = int_to_ptr.vmem [resolvable:$true] %s237
          %243 = dma.hbm_to_vmem [thread:$0]  %s236, 1024, %s238, %s225, 64, 64, 4
        $region36: #{tpu_custom_call.1} parent=31 // pred_fallthru
          _
      $region32: #{tpu_custom_call.1} parent=5 // pred_fallthru
        _
      %p244 = scmp.le.s32.totalorder 1, %s18
      %p245 = scmp.lt.s32.totalorder %s18, 3
      %p246 = pnand %p244, %p245
      %p247 = pneg %p246
      // Predicated region
      $region37: #{tpu_custom_call.1} parent=5 // pred_check
        _
      $region38: #{tpu_custom_call.1} parent=5 // pred_check_branch
        %249 = sbr.rel (%p246) target = $region40
      $region39: #{tpu_custom_call.1} parent=5 // pred_region
        %s250 = ssub.s32 %s18, 1
        %s251 = sand.u32 %s45, 1
        %s252 = scalar_lea.sflag [#allocation3], %s251
        %s253 = sand.u32 %s45, 1
        %s254 = smul.addr %s253, 64
        %s255 = scalar_lea.vmem [#allocation2], %s254
        // Predicated region
        $region41: #{tpu_custom_call.1} parent=39 // pred_check
          %p256 = pneg %p58
        $region42: #{tpu_custom_call.1} parent=39 // pred_check_branch
          %258 = sbr.rel (%p256) target = $region44
        $region43: #{tpu_custom_call.1} parent=39 // pred_region
          %259 = dma.done %s252, 1024
        $region44: #{tpu_custom_call.1} parent=39 // pred_fallthru
          _
        // Predicated region
        $region45: #{tpu_custom_call.1} parent=39 // pred_check
          %p260 = pneg %p79
        $region46: #{tpu_custom_call.1} parent=39 // pred_check_branch
          %262 = sbr.rel (%p260) target = $region48
        $region47: #{tpu_custom_call.1} parent=39 // pred_region
          %263 = dma.done [#allocation6], 1024
        $region48: #{tpu_custom_call.1} parent=39 // pred_fallthru
          _
        // Predicated region
        $region49: #{tpu_custom_call.1} parent=39 // pred_check
          %p264 = pneg %p121
        $region50: #{tpu_custom_call.1} parent=39 // pred_check_branch
          %266 = sbr.rel (%p264) target = $region52
        $region51: #{tpu_custom_call.1} parent=39 // pred_region
          %267 = dma.done [#allocation6], 8192
        $region52: #{tpu_custom_call.1} parent=39 // pred_fallthru
          _
        %s268 = sand.u32 %s45, 1
        %s269 = scalar_lea.sflag [#allocation3], %s268
        %s270 = sand.u32 %s45, 1
        %s271 = smul.addr %s270, 64
        %s272 = scalar_lea.vmem [#allocation2], %s271
        %p273 = pneg %p58
        %p274 = pneg %p55
        %p275 = pneg %p79
        %p276 = pneg %p76
        %p277 = pneg %p100
        %p278 = pneg %p97
        %p279 = pneg %p121
        %p280 = pneg %p118
        %p281 = pneg %p142
        %p282 = pneg %p139
        %p283 = pneg %p170
        %p284 = pneg %p167
        %s285 = sand.u32 %s157, 1
        %s286 = scalar_lea.sflag [#allocation4], %s285
        %s287 = sand.u32 %s157, 1
        %s288 = smul.addr %s287, 512
        %s289 = scalar_lea.vmem [#allocation8], %s288
        %s290 = sadd.s32 %s27, %s28
        %s291 = smul.u32 4, %s290
        %s292 = sadd.s32 %s27, %s28
        %s293 = smul.u32 4, %s292
        %v295 = vld [vmem:[%s255] sm:$0xf]
        %v296 = vld [vmem:[%s255 + $0x4] sm:$0xf]
        %v297 = vld [vmem:[%s255 + $0x8] sm:$0xf]
        %v298 = vld [vmem:[%s255 + $0xc] sm:$0xf]
        %v299 = vld [vmem:[%s255 + $0x10] sm:$0xf]
        %v300 = vld [vmem:[%s255 + $0x14] sm:$0xf]
        %v301 = vld [vmem:[%s255 + $0x18] sm:$0xf]
        %v302 = vld [vmem:[%s255 + $0x1c] sm:$0xf]
        %v303 = vld [vmem:[%s255 + $0x20] sm:$0xf]
        %v304 = vld [vmem:[%s255 + $0x24] sm:$0xf]
        %v305 = vld [vmem:[%s255 + $0x28] sm:$0xf]
        %v306 = vld [vmem:[%s255 + $0x2c] sm:$0xf]
        %v307 = vld [vmem:[%s255 + $0x30] sm:$0xf]
        %v308 = vld [vmem:[%s255 + $0x34] sm:$0xf]
        %v309 = vld [vmem:[%s255 + $0x38] sm:$0xf]
        %v310 = vld [vmem:[%s255 + $0x3c] sm:$0xf]
        %v327 = vcombine.low %v295, %v296
        %v328 = vcombine.low %v297, %v298
        %v329 = vcombine.low %v299, %v300
        %v330 = vcombine.low %v301, %v302
        %v331 = vcombine.low %v303, %v304
        %v332 = vcombine.low %v305, %v306
        %v333 = vcombine.low %v307, %v308
        %v334 = vcombine.low %v309, %v310
        %v343 = vpack.c.bf16 %v328, %v327
        %v344 = vpack.c.bf16 %v330, %v329
        %v345 = vpack.c.bf16 %v332, %v331
        %v346 = vpack.c.bf16 %v334, %v333
        %v347 = vld [vmem:[#allocation5] sm:$0xf]
        %v348 = vld [vmem:[#allocation5 + $0x4] sm:$0xf]
        %v349 = vld [vmem:[#allocation5 + $0x8] sm:$0xf]
        %v350 = vld [vmem:[#allocation5 + $0xc] sm:$0xf]
        %v351 = vld [vmem:[#allocation5 + $0x10] sm:$0xf]
        %v352 = vld [vmem:[#allocation5 + $0x14] sm:$0xf]
        %v353 = vld [vmem:[#allocation5 + $0x18] sm:$0xf]
        %v354 = vld [vmem:[#allocation5 + $0x1c] sm:$0xf]
        %v355 = vld [vmem:[#allocation5 + $0x20] sm:$0xf]
        %v356 = vld [vmem:[#allocation5 + $0x24] sm:$0xf]
        %v357 = vld [vmem:[#allocation5 + $0x28] sm:$0xf]
        %v358 = vld [vmem:[#allocation5 + $0x2c] sm:$0xf]
        %v359 = vld [vmem:[#allocation5 + $0x30] sm:$0xf]
        %v360 = vld [vmem:[#allocation5 + $0x34] sm:$0xf]
        %v361 = vld [vmem:[#allocation5 + $0x38] sm:$0xf]
        %v362 = vld [vmem:[#allocation5 + $0x3c] sm:$0xf]
        %v363 = vld [vmem:[%s2] sm:$0x1]
        %v365 = vlaneseq
        %v366 = vshrl.u32 %v365, 7
        %v367 = vsub.s32 0, %v366
        %v368 = vrot.slane %v363, %v367
        %v386 = vunpack.c.l.b16 %v347
        %v387 = vunpack.c.l.b16 %v348
        %v388 = vunpack.c.l.b16 %v349
        %v389 = vunpack.c.l.b16 %v350
        %v390 = vunpack.c.l.b16 %v351
        %v391 = vunpack.c.l.b16 %v352
        %v392 = vunpack.c.l.b16 %v353
        %v393 = vunpack.c.l.b16 %v354
        %v394 = vunpack.c.l.b16 %v355
        %v395 = vunpack.c.l.b16 %v356
        %v396 = vunpack.c.l.b16 %v357
        %v397 = vunpack.c.l.b16 %v358
        %v398 = vunpack.c.l.b16 %v359
        %v399 = vunpack.c.l.b16 %v360
        %v400 = vunpack.c.l.b16 %v361
        %v401 = vunpack.c.l.b16 %v362
        %v402 = vpack.c.b16 %v387, %v386
        %v403 = vpack.c.b16 %v389, %v388
        %v404 = vpack.c.b16 %v391, %v390
        %v405 = vpack.c.b16 %v393, %v392
        %v406 = vpack.c.b16 %v395, %v394
        %v407 = vpack.c.b16 %v397, %v396
        %v408 = vpack.c.b16 %v399, %v398
        %v409 = vpack.c.b16 %v401, %v400
        %418 = vmatprep.subr.bf16.mxu0 0
        %419 = vmatpush1.bf16.msra.mxu0 %v402
        %420 = vmatprep.subr.bf16.mxu0 0
        %421 = vmatpush1.bf16.msra.mxu0 %v403
        %422 = vmatprep.subr.bf16.mxu0 0
        %423 = vmatpush1.bf16.msra.mxu0 %v404
        %424 = vmatprep.subr.bf16.mxu0 0
        %425 = vmatpush1.bf16.msra.mxu0 %v405
        %426 = vmatprep.subr.bf16.mxu0 0
        %427 = vmatpush1.bf16.msra.mxu0 %v406
        %428 = vmatprep.subr.bf16.mxu0 0
        %429 = vmatpush1.bf16.msra.mxu0 %v407
        %430 = vmatprep.subr.bf16.mxu0 0
        %431 = vmatpush1.bf16.msra.mxu0 %v408
        %432 = vmatprep.subr.bf16.mxu0 0
        %433 = vmatpush1.bf16.msra.mxu0 %v409
        %434 = vmatprep.subr.bf16.mxu0 0
        %435 = vmatpush1.bf16.msra.mxu0 0
        %436 = vmatprep.subr.bf16.mxu0 0
        %437 = vmatpush1.bf16.msra.mxu0 0
        %438 = vmatprep.subr.bf16.mxu0 0
        %439 = vmatpush1.bf16.msra.mxu0 0
        %440 = vmatprep.subr.bf16.mxu0 0
        %441 = vmatpush1.bf16.msra.mxu0 0
        %442 = vmatprep.subr.bf16.mxu0 0
        %443 = vmatpush1.bf16.msra.mxu0 0
        %444 = vmatprep.subr.bf16.mxu0 0
        %445 = vmatpush1.bf16.msra.mxu0 0
        %446 = vmatprep.subr.bf16.mxu0 0
        %447 = vmatpush1.bf16.msra.mxu0 0
        %448 = vmatprep.subr.bf16.mxu0 0
        %449 = vmatpush1.bf16.msra.mxu0 0
        %450 = vmatprep.mubr.bf16.mxu0 0
        %451 = vmatmul.mubr.bf16.gmra.mrb[0].mxu0 %v343
        %v452 = vpop.f32.mrb[0].mxu0
        %v453 = vadd.f32 %v368, %v452
        %v454 = vpop.f32.mrb[0].mxu0
        %v455 = vpop.f32.mrb[0].mxu0
        %v456 = vadd.f32 %v368, %v455
        %v457 = vpop.f32.mrb[0].mxu0
        %458 = vmatprep.mubr.bf16.mxu0 0
        %459 = vmatmul.mubr.bf16.gmra.mrb[0].mxu0 %v344
        %v460 = vpop.f32.mrb[0].mxu0
        %v461 = vadd.f32 %v368, %v460
        %v462 = vpop.f32.mrb[0].mxu0
        %v463 = vpop.f32.mrb[0].mxu0
        %v464 = vadd.f32 %v368, %v463
        %v465 = vpop.f32.mrb[0].mxu0
        %466 = vmatprep.mubr.bf16.mxu0 0
        %467 = vmatmul.mubr.bf16.gmra.mrb[0].mxu0 %v345
        %v468 = vpop.f32.mrb[0].mxu0
        %v469 = vadd.f32 %v368, %v468
        %v470 = vpop.f32.mrb[0].mxu0
        %v471 = vpop.f32.mrb[0].mxu0
        %v472 = vadd.f32 %v368, %v471
        %v473 = vpop.f32.mrb[0].mxu0
        %474 = vmatprep.mubr.bf16.mxu0 0
        %475 = vmatmul.mubr.bf16.gmra.mrb[0].mxu0 %v346
        %v476 = vpop.f32.mrb[0].mxu0
        %v477 = vadd.f32 %v368, %v476
        %v478 = vpop.f32.mrb[0].mxu0
        %v479 = vpop.f32.mrb[0].mxu0
        %v480 = vadd.f32 %v368, %v479
        %v481 = vpop.f32.mrb[0].mxu0
        %482 = vdwg.mxu0
        %v483 = vpack.c.bf16 %v456, %v453
        %v484 = vpack.c.bf16 %v464, %v461
        %v485 = vpack.c.bf16 %v472, %v469
        %v486 = vpack.c.bf16 %v480, %v477
        %v487 = vld [vmem:[%s4] sm:$0x3]
        %v488 = vld [vmem:[#allocation7] sm:$0xff]
        %v489 = vld [vmem:[#allocation7 + $0x8] sm:$0xff]
        %v490 = vld [vmem:[#allocation7 + $0x10] sm:$0xff]
        %v491 = vld [vmem:[#allocation7 + $0x18] sm:$0xff]
        %v492 = vld [vmem:[#allocation7 + $0x20] sm:$0xff]
        %v493 = vld [vmem:[#allocation7 + $0x28] sm:$0xff]
        %v494 = vld [vmem:[#allocation7 + $0x30] sm:$0xff]
        %v495 = vld [vmem:[#allocation7 + $0x38] sm:$0xff]
        %v496 = vld [vmem:[#allocation7 + $0x40] sm:$0xff]
        %v497 = vld [vmem:[#allocation7 + $0x48] sm:$0xff]
        %v498 = vld [vmem:[#allocation7 + $0x50] sm:$0xff]
        %v499 = vld [vmem:[#allocation7 + $0x58] sm:$0xff]
        %v500 = vld [vmem:[#allocation7 + $0x60] sm:$0xff]
        %v501 = vld [vmem:[#allocation7 + $0x68] sm:$0xff]
        %v502 = vld [vmem:[#allocation7 + $0x70] sm:$0xff]
        %v503 = vld [vmem:[#allocation7 + $0x78] sm:$0xff]
        %v505 = vlaneseq
        %v506 = vshrl.u32 %v505, 7
        %v507 = vsub.s32 0, %v506
        %v508 = vrot.slane %v487, %v507
        %v509 = vlaneseq
        %v510 = vshrl.u32 %v509, 7
        %v511 = vsub.s32 1, %v510
        %v512 = vrot.slane %v487, %v511
        %v531 = vunpack.c.l.b16 %v488
        %v532 = vunpack.c.h.b16 %v488
        %v533 = vunpack.c.l.b16 %v489
        %v534 = vunpack.c.h.b16 %v489
        %v535 = vunpack.c.l.b16 %v490
        %v536 = vunpack.c.h.b16 %v490
        %v537 = vunpack.c.l.b16 %v491
        %v538 = vunpack.c.h.b16 %v491
        %v539 = vunpack.c.l.b16 %v492
        %v540 = vunpack.c.h.b16 %v492
        %v541 = vunpack.c.l.b16 %v493
        %v542 = vunpack.c.h.b16 %v493
        %v543 = vunpack.c.l.b16 %v494
        %v544 = vunpack.c.h.b16 %v494
        %v545 = vunpack.c.l.b16 %v495
        %v546 = vunpack.c.h.b16 %v495
        %v547 = vunpack.c.l.b16 %v496
        %v548 = vunpack.c.h.b16 %v496
        %v549 = vunpack.c.l.b16 %v497
        %v550 = vunpack.c.h.b16 %v497
        %v551 = vunpack.c.l.b16 %v498
        %v552 = vunpack.c.h.b16 %v498
        %v553 = vunpack.c.l.b16 %v499
        %v554 = vunpack.c.h.b16 %v499
        %v555 = vunpack.c.l.b16 %v500
        %v556 = vunpack.c.h.b16 %v500
        %v557 = vunpack.c.l.b16 %v501
        %v558 = vunpack.c.h.b16 %v501
        %v559 = vunpack.c.l.b16 %v502
        %v560 = vunpack.c.h.b16 %v502
        %v561 = vunpack.c.l.b16 %v503
        %v562 = vunpack.c.h.b16 %v503
        %v563 = vpack.c.b16 %v533, %v531
        %v564 = vpack.c.b16 %v534, %v532
        %v565 = vpack.c.b16 %v537, %v535
        %v566 = vpack.c.b16 %v538, %v536
        %v567 = vpack.c.b16 %v541, %v539
        %v568 = vpack.c.b16 %v542, %v540
        %v569 = vpack.c.b16 %v545, %v543
        %v570 = vpack.c.b16 %v546, %v544
        %v571 = vpack.c.b16 %v549, %v547
        %v572 = vpack.c.b16 %v550, %v548
        %v573 = vpack.c.b16 %v553, %v551
        %v574 = vpack.c.b16 %v554, %v552
        %v575 = vpack.c.b16 %v557, %v555
        %v576 = vpack.c.b16 %v558, %v556
        %v577 = vpack.c.b16 %v561, %v559
        %v578 = vpack.c.b16 %v562, %v560
        %595 = vmatprep.subr.bf16.mxu0 %v564
        %596 = vmatpush1.bf16.msra.mxu0 %v563
        %597 = vmatprep.subr.bf16.mxu0 %v566
        %598 = vmatpush1.bf16.msra.mxu0 %v565
        %599 = vmatprep.subr.bf16.mxu0 %v568
        %600 = vmatpush1.bf16.msra.mxu0 %v567
        %601 = vmatprep.subr.bf16.mxu0 %v570
        %602 = vmatpush1.bf16.msra.mxu0 %v569
        %603 = vmatprep.subr.bf16.mxu0 %v572
        %604 = vmatpush1.bf16.msra.mxu0 %v571
        %605 = vmatprep.subr.bf16.mxu0 %v574
        %606 = vmatpush1.bf16.msra.mxu0 %v573
        %607 = vmatprep.subr.bf16.mxu0 %v576
        %608 = vmatpush1.bf16.msra.mxu0 %v575
        %609 = vmatprep.subr.bf16.mxu0 %v578
        %610 = vmatpush1.bf16.msra.mxu0 %v577
        %611 = vmatprep.subr.bf16.mxu0 0
        %612 = vmatpush1.bf16.msra.mxu0 0
        %613 = vmatprep.subr.bf16.mxu0 0
        %614 = vmatpush1.bf16.msra.mxu0 0
        %615 = vmatprep.subr.bf16.mxu0 0
        %616 = vmatpush1.bf16.msra.mxu0 0
        %617 = vmatprep.subr.bf16.mxu0 0
        %618 = vmatpush1.bf16.msra.mxu0 0
        %619 = vmatprep.subr.bf16.mxu0 0
        %620 = vmatpush1.bf16.msra.mxu0 0
        %621 = vmatprep.subr.bf16.mxu0 0
        %622 = vmatpush1.bf16.msra.mxu0 0
        %623 = vmatprep.subr.bf16.mxu0 0
        %624 = vmatpush1.bf16.msra.mxu0 0
        %625 = vmatprep.subr.bf16.mxu0 0
        %626 = vmatpush1.bf16.msra.mxu0 0
        %627 = vmatprep.mubr.bf16.mxu0 0
        %628 = vmatmul.mubr.bf16.gmra.mrb[0].mxu0 %v483
        %v629 = vpop.f32.mrb[0].mxu0
        %v630 = vadd.f32 %v508, %v629
        %v631 = vpop.f32.mrb[0].mxu0
        %v632 = vadd.f32 %v512, %v631
        %v633 = vpop.f32.mrb[0].mxu0
        %v634 = vadd.f32 %v508, %v633
        %v635 = vpop.f32.mrb[0].mxu0
        %v636 = vadd.f32 %v512, %v635
        %637 = vmatprep.mubr.bf16.mxu0 0
        %638 = vmatmul.mubr.bf16.gmra.mrb[0].mxu0 %v484
        %v639 = vpop.f32.mrb[0].mxu0
        %v640 = vadd.f32 %v508, %v639
        %v641 = vpop.f32.mrb[0].mxu0
        %v642 = vadd.f32 %v512, %v641
        %v643 = vpop.f32.mrb[0].mxu0
        %v644 = vadd.f32 %v508, %v643
        %v645 = vpop.f32.mrb[0].mxu0
        %v646 = vadd.f32 %v512, %v645
        %647 = vmatprep.mubr.bf16.mxu0 0
        %648 = vmatmul.mubr.bf16.gmra.mrb[0].mxu0 %v485
        %v649 = vpop.f32.mrb[0].mxu0
        %v650 = vadd.f32 %v508, %v649
        %v651 = vpop.f32.mrb[0].mxu0
        %v652 = vadd.f32 %v512, %v651
        %v653 = vpop.f32.mrb[0].mxu0
        %v654 = vadd.f32 %v508, %v653
        %v655 = vpop.f32.mrb[0].mxu0
        %v656 = vadd.f32 %v512, %v655
        %657 = vmatprep.mubr.bf16.mxu0 0
        %658 = vmatmul.mubr.bf16.gmra.mrb[0].mxu0 %v486
        %v659 = vpop.f32.mrb[0].mxu0
        %v660 = vadd.f32 %v508, %v659
        %v661 = vpop.f32.mrb[0].mxu0
        %v662 = vadd.f32 %v512, %v661
        %v663 = vpop.f32.mrb[0].mxu0
        %v664 = vadd.f32 %v508, %v663
        %v665 = vpop.f32.mrb[0].mxu0
        %v666 = vadd.f32 %v512, %v665
        %667 = vdwg.mxu0
        %v684 = vcombine.low %v630, %v632
        %v685 = vcombine.high %v630, %v632
        %v686 = vcombine.low %v634, %v636
        %v687 = vcombine.high %v634, %v636
        %v688 = vcombine.low %v640, %v642
        %v689 = vcombine.high %v640, %v642
        %v690 = vcombine.low %v644, %v646
        %v691 = vcombine.high %v644, %v646
        %v692 = vcombine.low %v650, %v652
        %v693 = vcombine.high %v650, %v652
        %v694 = vcombine.low %v654, %v656
        %v695 = vcombine.high %v654, %v656
        %v696 = vcombine.low %v660, %v662
        %v697 = vcombine.high %v660, %v662
        %v698 = vcombine.low %v664, %v666
        %v699 = vcombine.high %v664, %v666
        %716 = vst [vmem:[%s289] sm:$0xff] %v684
        %717 = vst [vmem:[%s289 + $0x10] sm:$0xff] %v685
        %718 = vst [vmem:[%s289 + $0x20] sm:$0xff] %v686
        %719 = vst [vmem:[%s289 + $0x30] sm:$0xff] %v687
        %720 = vst [vmem:[%s289 + $0x80] sm:$0xff] %v688
        %721 = vst [vmem:[%s289 + $0x90] sm:$0xff] %v689
        %722 = vst [vmem:[%s289 + $0xa0] sm:$0xff] %v690
        %723 = vst [vmem:[%s289 + $0xb0] sm:$0xff] %v691
        %724 = vst [vmem:[%s289 + $0x100] sm:$0xff] %v692
        %725 = vst [vmem:[%s289 + $0x110] sm:$0xff] %v693
        %726 = vst [vmem:[%s289 + $0x120] sm:$0xff] %v694
        %727 = vst [vmem:[%s289 + $0x130] sm:$0xff] %v695
        %728 = vst [vmem:[%s289 + $0x180] sm:$0xff] %v696
        %729 = vst [vmem:[%s289 + $0x190] sm:$0xff] %v697
        %730 = vst [vmem:[%s289 + $0x1a0] sm:$0xff] %v698
        %731 = vst [vmem:[%s289 + $0x1b0] sm:$0xff] %v699
        %s732 = scalar_lea.vmem [#allocation7], 128
        %v733 = vld [vmem:[%s732] sm:$0xff]
        %v734 = vld [vmem:[%s732 + $0x8] sm:$0xff]
        %v735 = vld [vmem:[%s732 + $0x10] sm:$0xff]
        %v736 = vld [vmem:[%s732 + $0x18] sm:$0xff]
        %v737 = vld [vmem:[%s732 + $0x20] sm:$0xff]
        %v738 = vld [vmem:[%s732 + $0x28] sm:$0xff]
        %v739 = vld [vmem:[%s732 + $0x30] sm:$0xff]
        %v740 = vld [vmem:[%s732 + $0x38] sm:$0xff]
        %v741 = vld [vmem:[%s732 + $0x40] sm:$0xff]
        %v742 = vld [vmem:[%s732 + $0x48] sm:$0xff]
        %v743 = vld [vmem:[%s732 + $0x50] sm:$0xff]
        %v744 = vld [vmem:[%s732 + $0x58] sm:$0xff]
        %v745 = vld [vmem:[%s732 + $0x60] sm:$0xff]
        %v746 = vld [vmem:[%s732 + $0x68] sm:$0xff]
        %v747 = vld [vmem:[%s732 + $0x70] sm:$0xff]
        %v748 = vld [vmem:[%s732 + $0x78] sm:$0xff]
        %v765 = vunpack.c.l.b16 %v733
        %v766 = vunpack.c.h.b16 %v733
        %v767 = vunpack.c.l.b16 %v734
        %v768 = vunpack.c.h.b16 %v734
        %v769 = vunpack.c.l.b16 %v735
        %v770 = vunpack.c.h.b16 %v735
        %v771 = vunpack.c.l.b16 %v736
        %v772 = vunpack.c.h.b16 %v736
        %v773 = vunpack.c.l.b16 %v737
        %v774 = vunpack.c.h.b16 %v737
        %v775 = vunpack.c.l.b16 %v738
        %v776 = vunpack.c.h.b16 %v738
        %v777 = vunpack.c.l.b16 %v739
        %v778 = vunpack.c.h.b16 %v739
        %v779 = vunpack.c.l.b16 %v740
        %v780 = vunpack.c.h.b16 %v740
        %v781 = vunpack.c.l.b16 %v741
        %v782 = vunpack.c.h.b16 %v741
        %v783 = vunpack.c.l.b16 %v742
        %v784 = vunpack.c.h.b16 %v742
        %v785 = vunpack.c.l.b16 %v743
        %v786 = vunpack.c.h.b16 %v743
        %v787 = vunpack.c.l.b16 %v744
        %v788 = vunpack.c.h.b16 %v744
        %v789 = vunpack.c.l.b16 %v745
        %v790 = vunpack.c.h.b16 %v745
        %v791 = vunpack.c.l.b16 %v746
        %v792 = vunpack.c.h.b16 %v746
        %v793 = vunpack.c.l.b16 %v747
        %v794 = vunpack.c.h.b16 %v747
        %v795 = vunpack.c.l.b16 %v748
        %v796 = vunpack.c.h.b16 %v748
        %v797 = vpack.c.b16 %v767, %v765
        %v798 = vpack.c.b16 %v768, %v766
        %v799 = vpack.c.b16 %v771, %v769
        %v800 = vpack.c.b16 %v772, %v770
        %v801 = vpack.c.b16 %v775, %v773
        %v802 = vpack.c.b16 %v776, %v774
        %v803 = vpack.c.b16 %v779, %v777
        %v804 = vpack.c.b16 %v780, %v778
        %v805 = vpack.c.b16 %v783, %v781
        %v806 = vpack.c.b16 %v784, %v782
        %v807 = vpack.c.b16 %v787, %v785
        %v808 = vpack.c.b16 %v788, %v786
        %v809 = vpack.c.b16 %v791, %v789
        %v810 = vpack.c.b16 %v792, %v790
        %v811 = vpack.c.b16 %v795, %v793
        %v812 = vpack.c.b16 %v796, %v794
        %829 = vmatprep.subr.bf16.mxu0 %v798
        %830 = vmatpush1.bf16.msra.mxu0 %v797
        %831 = vmatprep.subr.bf16.mxu0 %v800
        %832 = vmatpush1.bf16.msra.mxu0 %v799
        %833 = vmatprep.subr.bf16.mxu0 %v802
        %834 = vmatpush1.bf16.msra.mxu0 %v801
        %835 = vmatprep.subr.bf16.mxu0 %v804
        %836 = vmatpush1.bf16.msra.mxu0 %v803
        %837 = vmatprep.subr.bf16.mxu0 %v806
        %838 = vmatpush1.bf16.msra.mxu0 %v805
        %839 = vmatprep.subr.bf16.mxu0 %v808
        %840 = vmatpush1.bf16.msra.mxu0 %v807
        %841 = vmatprep.subr.bf16.mxu0 %v810
        %842 = vmatpush1.bf16.msra.mxu0 %v809
        %843 = vmatprep.subr.bf16.mxu0 %v812
        %844 = vmatpush1.bf16.msra.mxu0 %v811
        %845 = vmatprep.subr.bf16.mxu0 0
        %846 = vmatpush1.bf16.msra.mxu0 0
        %847 = vmatprep.subr.bf16.mxu0 0
        %848 = vmatpush1.bf16.msra.mxu0 0
        %849 = vmatprep.subr.bf16.mxu0 0
        %850 = vmatpush1.bf16.msra.mxu0 0
        %851 = vmatprep.subr.bf16.mxu0 0
        %852 = vmatpush1.bf16.msra.mxu0 0
        %853 = vmatprep.subr.bf16.mxu0 0
        %854 = vmatpush1.bf16.msra.mxu0 0
        %855 = vmatprep.subr.bf16.mxu0 0
        %856 = vmatpush1.bf16.msra.mxu0 0
        %857 = vmatprep.subr.bf16.mxu0 0
        %858 = vmatpush1.bf16.msra.mxu0 0
        %859 = vmatprep.subr.bf16.mxu0 0
        %860 = vmatpush1.bf16.msra.mxu0 0
        %861 = vmatprep.mubr.bf16.mxu0 0
        %862 = vmatmul.mubr.bf16.gmra.mrb[0].mxu0 %v483
        %v863 = vpop.f32.mrb[0].mxu0
        %v864 = vadd.f32 %v508, %v863
        %v865 = vpop.f32.mrb[0].mxu0
        %v866 = vadd.f32 %v512, %v865
        %v867 = vpop.f32.mrb[0].mxu0
        %v868 = vadd.f32 %v508, %v867
        %v869 = vpop.f32.mrb[0].mxu0
        %v870 = vadd.f32 %v512, %v869
        %871 = vmatprep.mubr.bf16.mxu0 0
        %872 = vmatmul.mubr.bf16.gmra.mrb[0].mxu0 %v484
        %v873 = vpop.f32.mrb[0].mxu0
        %v874 = vadd.f32 %v508, %v873
        %v875 = vpop.f32.mrb[0].mxu0
        %v876 = vadd.f32 %v512, %v875
        %v877 = vpop.f32.mrb[0].mxu0
        %v878 = vadd.f32 %v508, %v877
        %v879 = vpop.f32.mrb[0].mxu0
        %v880 = vadd.f32 %v512, %v879
        %881 = vmatprep.mubr.bf16.mxu0 0
        %882 = vmatmul.mubr.bf16.gmra.mrb[0].mxu0 %v485
        %v883 = vpop.f32.mrb[0].mxu0
        %v884 = vadd.f32 %v508, %v883
        %v885 = vpop.f32.mrb[0].mxu0
        %v886 = vadd.f32 %v512, %v885
        %v887 = vpop.f32.mrb[0].mxu0
        %v888 = vadd.f32 %v508, %v887
        %v889 = vpop.f32.mrb[0].mxu0
        %v890 = vadd.f32 %v512, %v889
        %891 = vmatprep.mubr.bf16.mxu0 0
        %892 = vmatmul.mubr.bf16.gmra.mrb[0].mxu0 %v486
        %v893 = vpop.f32.mrb[0].mxu0
        %v894 = vadd.f32 %v508, %v893
        %v895 = vpop.f32.mrb[0].mxu0
        %v896 = vadd.f32 %v512, %v895
        %v897 = vpop.f32.mrb[0].mxu0
        %v898 = vadd.f32 %v508, %v897
        %v899 = vpop.f32.mrb[0].mxu0
        %v900 = vadd.f32 %v512, %v899
        %901 = vdwg.mxu0
        %v918 = vcombine.low %v864, %v866
        %v919 = vcombine.high %v864, %v866
        %v920 = vcombine.low %v868, %v870
        %v921 = vcombine.high %v868, %v870
        %v922 = vcombine.low %v874, %v876
        %v923 = vcombine.high %v874, %v876
        %v924 = vcombine.low %v878, %v880
        %v925 = vcombine.high %v878, %v880
        %v926 = vcombine.low %v884, %v886
        %v927 = vcombine.high %v884, %v886
        %v928 = vcombine.low %v888, %v890
        %v929 = vcombine.high %v888, %v890
        %v930 = vcombine.low %v894, %v896
        %v931 = vcombine.high %v894, %v896
        %v932 = vcombine.low %v898, %v900
        %v933 = vcombine.high %v898, %v900
        %s950 = scalar_lea.vmem %s289, 8 [#allocation8]
        %951 = vst [vmem:[%s950] sm:$0xff] %v918
        %952 = vst [vmem:[%s950 + $0x10] sm:$0xff] %v919
        %953 = vst [vmem:[%s950 + $0x20] sm:$0xff] %v920
        %954 = vst [vmem:[%s950 + $0x30] sm:$0xff] %v921
        %955 = vst [vmem:[%s950 + $0x80] sm:$0xff] %v922
        %956 = vst [vmem:[%s950 + $0x90] sm:$0xff] %v923
        %957 = vst [vmem:[%s950 + $0xa0] sm:$0xff] %v924
        %958 = vst [vmem:[%s950 + $0xb0] sm:$0xff] %v925
        %959 = vst [vmem:[%s950 + $0x100] sm:$0xff] %v926
        %960 = vst [vmem:[%s950 + $0x110] sm:$0xff] %v927
        %961 = vst [vmem:[%s950 + $0x120] sm:$0xff] %v928
        %962 = vst [vmem:[%s950 + $0x130] sm:$0xff] %v929
        %963 = vst [vmem:[%s950 + $0x180] sm:$0xff] %v930
        %964 = vst [vmem:[%s950 + $0x190] sm:$0xff] %v931
        %965 = vst [vmem:[%s950 + $0x1a0] sm:$0xff] %v932
        %966 = vst [vmem:[%s950 + $0x1b0] sm:$0xff] %v933
        %s967 = scalar_lea.vmem [#allocation7], 256
        %v968 = vld [vmem:[%s967] sm:$0xff]
        %v969 = vld [vmem:[%s967 + $0x8] sm:$0xff]
        %v970 = vld [vmem:[%s967 + $0x10] sm:$0xff]
        %v971 = vld [vmem:[%s967 + $0x18] sm:$0xff]
        %v972 = vld [vmem:[%s967 + $0x20] sm:$0xff]
        %v973 = vld [vmem:[%s967 + $0x28] sm:$0xff]
        %v974 = vld [vmem:[%s967 + $0x30] sm:$0xff]
        %v975 = vld [vmem:[%s967 + $0x38] sm:$0xff]
        %v976 = vld [vmem:[%s967 + $0x40] sm:$0xff]
        %v977 = vld [vmem:[%s967 + $0x48] sm:$0xff]
        %v978 = vld [vmem:[%s967 + $0x50] sm:$0xff]
        %v979 = vld [vmem:[%s967 + $0x58] sm:$0xff]
        %v980 = vld [vmem:[%s967 + $0x60] sm:$0xff]
        %v981 = vld [vmem:[%s967 + $0x68] sm:$0xff]
        %v982 = vld [vmem:[%s967 + $0x70] sm:$0xff]
        %v983 = vld [vmem:[%s967 + $0x78] sm:$0xff]
        %v1000 = vunpack.c.l.b16 %v968
        %v1001 = vunpack.c.h.b16 %v968
        %v1002 = vunpack.c.l.b16 %v969
        %v1003 = vunpack.c.h.b16 %v969
        %v1004 = vunpack.c.l.b16 %v970
        %v1005 = vunpack.c.h.b16 %v970
        %v1006 = vunpack.c.l.b16 %v971
        %v1007 = vunpack.c.h.b16 %v971
        %v1008 = vunpack.c.l.b16 %v972
        %v1009 = vunpack.c.h.b16 %v972
        %v1010 = vunpack.c.l.b16 %v973
        %v1011 = vunpack.c.h.b16 %v973
        %v1012 = vunpack.c.l.b16 %v974
        %v1013 = vunpack.c.h.b16 %v974
        %v1014 = vunpack.c.l.b16 %v975
        %v1015 = vunpack.c.h.b16 %v975
        %v1016 = vunpack.c.l.b16 %v976
        %v1017 = vunpack.c.h.b16 %v976
        %v1018 = vunpack.c.l.b16 %v977
        %v1019 = vunpack.c.h.b16 %v977
        %v1020 = vunpack.c.l.b16 %v978
        %v1021 = vunpack.c.h.b16 %v978
        %v1022 = vunpack.c.l.b16 %v979
        %v1023 = vunpack.c.h.b16 %v979
        %v1024 = vunpack.c.l.b16 %v980
        %v1025 = vunpack.c.h.b16 %v980
        %v1026 = vunpack.c.l.b16 %v981
        %v1027 = vunpack.c.h.b16 %v981
        %v1028 = vunpack.c.l.b16 %v982
        %v1029 = vunpack.c.h.b16 %v982
        %v1030 = vunpack.c.l.b16 %v983
        %v1031 = vunpack.c.h.b16 %v983
        %v1032 = vpack.c.b16 %v1002, %v1000
        %v1033 = vpack.c.b16 %v1003, %v1001
        %v1034 = vpack.c.b16 %v1006, %v1004
        %v1035 = vpack.c.b16 %v1007, %v1005
        %v1036 = vpack.c.b16 %v1010, %v1008
        %v1037 = vpack.c.b16 %v1011, %v1009
        %v1038 = vpack.c.b16 %v1014, %v1012
        %v1039 = vpack.c.b16 %v1015, %v1013
        %v1040 = vpack.c.b16 %v1018, %v1016
        %v1041 = vpack.c.b16 %v1019, %v1017
        %v1042 = vpack.c.b16 %v1022, %v1020
        %v1043 = vpack.c.b16 %v1023, %v1021
        %v1044 = vpack.c.b16 %v1026, %v1024
        %v1045 = vpack.c.b16 %v1027, %v1025
        %v1046 = vpack.c.b16 %v1030, %v1028
        %v1047 = vpack.c.b16 %v1031, %v1029
        %1064 = vmatprep.subr.bf16.mxu0 %v1033
        %1065 = vmatpush1.bf16.msra.mxu0 %v1032
        %1066 = vmatprep.subr.bf16.mxu0 %v1035
        %1067 = vmatpush1.bf16.msra.mxu0 %v1034
        %1068 = vmatprep.subr.bf16.mxu0 %v1037
        %1069 = vmatpush1.bf16.msra.mxu0 %v1036
        %1070 = vmatprep.subr.bf16.mxu0 %v1039
        %1071 = vmatpush1.bf16.msra.mxu0 %v1038
        %1072 = vmatprep.subr.bf16.mxu0 %v1041
        %1073 = vmatpush1.bf16.msra.mxu0 %v1040
        %1074 = vmatprep.subr.bf16.mxu0 %v1043
        %1075 = vmatpush1.bf16.msra.mxu0 %v1042
        %1076 = vmatprep.subr.bf16.mxu0 %v1045
        %1077 = vmatpush1.bf16.msra.mxu0 %v1044
        %1078 = vmatprep.subr.bf16.mxu0 %v1047
        %1079 = vmatpush1.bf16.msra.mxu0 %v1046
        %1080 = vmatprep.subr.bf16.mxu0 0
        %1081 = vmatpush1.bf16.msra.mxu0 0
        %1082 = vmatprep.subr.bf16.mxu0 0
        %1083 = vmatpush1.bf16.msra.mxu0 0
        %1084 = vmatprep.subr.bf16.mxu0 0
        %1085 = vmatpush1.bf16.msra.mxu0 0
        %1086 = vmatprep.subr.bf16.mxu0 0
        %1087 = vmatpush1.bf16.msra.mxu0 0
        %1088 = vmatprep.subr.bf16.mxu0 0
        %1089 = vmatpush1.bf16.msra.mxu0 0
        %1090 = vmatprep.subr.bf16.mxu0 0
        %1091 = vmatpush1.bf16.msra.mxu0 0
        %1092 = vmatprep.subr.bf16.mxu0 0
        %1093 = vmatpush1.bf16.msra.mxu0 0
        %1094 = vmatprep.subr.bf16.mxu0 0
        %1095 = vmatpush1.bf16.msra.mxu0 0
        %1096 = vmatprep.mubr.bf16.mxu0 0
        %1097 = vmatmul.mubr.bf16.gmra.mrb[0].mxu0 %v483
        %v1098 = vpop.f32.mrb[0].mxu0
        %v1099 = vadd.f32 %v508, %v1098
        %v1100 = vpop.f32.mrb[0].mxu0
        %v1101 = vadd.f32 %v512, %v1100
        %v1102 = vpop.f32.mrb[0].mxu0
        %v1103 = vadd.f32 %v508, %v1102
        %v1104 = vpop.f32.mrb[0].mxu0
        %v1105 = vadd.f32 %v512, %v1104
        %1106 = vmatprep.mubr.bf16.mxu0 0
        %1107 = vmatmul.mubr.bf16.gmra.mrb[0].mxu0 %v484
        %v1108 = vpop.f32.mrb[0].mxu0
        %v1109 = vadd.f32 %v508, %v1108
        %v1110 = vpop.f32.mrb[0].mxu0
        %v1111 = vadd.f32 %v512, %v1110
        %v1112 = vpop.f32.mrb[0].mxu0
        %v1113 = vadd.f32 %v508, %v1112
        %v1114 = vpop.f32.mrb[0].mxu0
        %v1115 = vadd.f32 %v512, %v1114
        %1116 = vmatprep.mubr.bf16.mxu0 0
        %1117 = vmatmul.mubr.bf16.gmra.mrb[0].mxu0 %v485
        %v1118 = vpop.f32.mrb[0].mxu0
        %v1119 = vadd.f32 %v508, %v1118
        %v1120 = vpop.f32.mrb[0].mxu0
        %v1121 = vadd.f32 %v512, %v1120
        %v1122 = vpop.f32.mrb[0].mxu0
        %v1123 = vadd.f32 %v508, %v1122
        %v1124 = vpop.f32.mrb[0].mxu0
        %v1125 = vadd.f32 %v512, %v1124
        %1126 = vmatprep.mubr.bf16.mxu0 0
        %1127 = vmatmul.mubr.bf16.gmra.mrb[0].mxu0 %v486
        %v1128 = vpop.f32.mrb[0].mxu0
        %v1129 = vadd.f32 %v508, %v1128
        %v1130 = vpop.f32.mrb[0].mxu0
        %v1131 = vadd.f32 %v512, %v1130
        %v1132 = vpop.f32.mrb[0].mxu0
        %v1133 = vadd.f32 %v508, %v1132
        %v1134 = vpop.f32.mrb[0].mxu0
        %v1135 = vadd.f32 %v512, %v1134
        %1136 = vdwg.mxu0
        %v1153 = vcombine.low %v1099, %v1101
        %v1154 = vcombine.high %v1099, %v1101
        %v1155 = vcombine.low %v1103, %v1105
        %v1156 = vcombine.high %v1103, %v1105
        %v1157 = vcombine.low %v1109, %v1111
        %v1158 = vcombine.high %v1109, %v1111
        %v1159 = vcombine.low %v1113, %v1115
        %v1160 = vcombine.high %v1113, %v1115
        %v1161 = vcombine.low %v1119, %v1121
        %v1162 = vcombine.high %v1119, %v1121
        %v1163 = vcombine.low %v1123, %v1125
        %v1164 = vcombine.high %v1123, %v1125
        %v1165 = vcombine.low %v1129, %v1131
        %v1166 = vcombine.high %v1129, %v1131
        %v1167 = vcombine.low %v1133, %v1135
        %v1168 = vcombine.high %v1133, %v1135
        %s1185 = scalar_lea.vmem %s289, 64 [#allocation8]
        %1186 = vst [vmem:[%s1185] sm:$0xff] %v1153
        %1187 = vst [vmem:[%s1185 + $0x10] sm:$0xff] %v1154
        %1188 = vst [vmem:[%s1185 + $0x20] sm:$0xff] %v1155
        %1189 = vst [vmem:[%s1185 + $0x30] sm:$0xff] %v1156
        %1190 = vst [vmem:[%s1185 + $0x80] sm:$0xff] %v1157
        %1191 = vst [vmem:[%s1185 + $0x90] sm:$0xff] %v1158
        %1192 = vst [vmem:[%s1185 + $0xa0] sm:$0xff] %v1159
        %1193 = vst [vmem:[%s1185 + $0xb0] sm:$0xff] %v1160
        %1194 = vst [vmem:[%s1185 + $0x100] sm:$0xff] %v1161
        %1195 = vst [vmem:[%s1185 + $0x110] sm:$0xff] %v1162
        %1196 = vst [vmem:[%s1185 + $0x120] sm:$0xff] %v1163
        %1197 = vst [vmem:[%s1185 + $0x130] sm:$0xff] %v1164
        %1198 = vst [vmem:[%s1185 + $0x180] sm:$0xff] %v1165
        %1199 = vst [vmem:[%s1185 + $0x190] sm:$0xff] %v1166
        %1200 = vst [vmem:[%s1185 + $0x1a0] sm:$0xff] %v1167
        %1201 = vst [vmem:[%s1185 + $0x1b0] sm:$0xff] %v1168
        %s1202 = scalar_lea.vmem [#allocation7], 384
        %v1203 = vld [vmem:[%s1202] sm:$0xff]
        %v1204 = vld [vmem:[%s1202 + $0x8] sm:$0xff]
        %v1205 = vld [vmem:[%s1202 + $0x10] sm:$0xff]
        %v1206 = vld [vmem:[%s1202 + $0x18] sm:$0xff]
        %v1207 = vld [vmem:[%s1202 + $0x20] sm:$0xff]
        %v1208 = vld [vmem:[%s1202 + $0x28] sm:$0xff]
        %v1209 = vld [vmem:[%s1202 + $0x30] sm:$0xff]
        %v1210 = vld [vmem:[%s1202 + $0x38] sm:$0xff]
        %v1211 = vld [vmem:[%s1202 + $0x40] sm:$0xff]
        %v1212 = vld [vmem:[%s1202 + $0x48] sm:$0xff]
        %v1213 = vld [vmem:[%s1202 + $0x50] sm:$0xff]
        %v1214 = vld [vmem:[%s1202 + $0x58] sm:$0xff]
        %v1215 = vld [vmem:[%s1202 + $0x60] sm:$0xff]
        %v1216 = vld [vmem:[%s1202 + $0x68] sm:$0xff]
        %v1217 = vld [vmem:[%s1202 + $0x70] sm:$0xff]
        %v1218 = vld [vmem:[%s1202 + $0x78] sm:$0xff]
        %v1235 = vunpack.c.l.b16 %v1203
        %v1236 = vunpack.c.h.b16 %v1203
        %v1237 = vunpack.c.l.b16 %v1204
        %v1238 = vunpack.c.h.b16 %v1204
        %v1239 = vunpack.c.l.b16 %v1205
        %v1240 = vunpack.c.h.b16 %v1205
        %v1241 = vunpack.c.l.b16 %v1206
        %v1242 = vunpack.c.h.b16 %v1206
        %v1243 = vunpack.c.l.b16 %v1207
        %v1244 = vunpack.c.h.b16 %v1207
        %v1245 = vunpack.c.l.b16 %v1208
        %v1246 = vunpack.c.h.b16 %v1208
        %v1247 = vunpack.c.l.b16 %v1209
        %v1248 = vunpack.c.h.b16 %v1209
        %v1249 = vunpack.c.l.b16 %v1210
        %v1250 = vunpack.c.h.b16 %v1210
        %v1251 = vunpack.c.l.b16 %v1211
        %v1252 = vunpack.c.h.b16 %v1211
        %v1253 = vunpack.c.l.b16 %v1212
        %v1254 = vunpack.c.h.b16 %v1212
        %v1255 = vunpack.c.l.b16 %v1213
        %v1256 = vunpack.c.h.b16 %v1213
        %v1257 = vunpack.c.l.b16 %v1214
        %v1258 = vunpack.c.h.b16 %v1214
        %v1259 = vunpack.c.l.b16 %v1215
        %v1260 = vunpack.c.h.b16 %v1215
        %v1261 = vunpack.c.l.b16 %v1216
        %v1262 = vunpack.c.h.b16 %v1216
        %v1263 = vunpack.c.l.b16 %v1217
        %v1264 = vunpack.c.h.b16 %v1217
        %v1265 = vunpack.c.l.b16 %v1218
        %v1266 = vunpack.c.h.b16 %v1218
        %v1267 = vpack.c.b16 %v1237, %v1235
        %v1268 = vpack.c.b16 %v1238, %v1236
        %v1269 = vpack.c.b16 %v1241, %v1239
        %v1270 = vpack.c.b16 %v1242, %v1240
        %v1271 = vpack.c.b16 %v1245, %v1243
        %v1272 = vpack.c.b16 %v1246, %v1244
        %v1273 = vpack.c.b16 %v1249, %v1247
        %v1274 = vpack.c.b16 %v1250, %v1248
        %v1275 = vpack.c.b16 %v1253, %v1251
        %v1276 = vpack.c.b16 %v1254, %v1252
        %v1277 = vpack.c.b16 %v1257, %v1255
        %v1278 = vpack.c.b16 %v1258, %v1256
        %v1279 = vpack.c.b16 %v1261, %v1259
        %v1280 = vpack.c.b16 %v1262, %v1260
        %v1281 = vpack.c.b16 %v1265, %v1263
        %v1282 = vpack.c.b16 %v1266, %v1264
        %1299 = vmatprep.subr.bf16.mxu0 %v1268
        %1300 = vmatpush1.bf16.msra.mxu0 %v1267
        %1301 = vmatprep.subr.bf16.mxu0 %v1270
        %1302 = vmatpush1.bf16.msra.mxu0 %v1269
        %1303 = vmatprep.subr.bf16.mxu0 %v1272
        %1304 = vmatpush1.bf16.msra.mxu0 %v1271
        %1305 = vmatprep.subr.bf16.mxu0 %v1274
        %1306 = vmatpush1.bf16.msra.mxu0 %v1273
        %1307 = vmatprep.subr.bf16.mxu0 %v1276
        %1308 = vmatpush1.bf16.msra.mxu0 %v1275
        %1309 = vmatprep.subr.bf16.mxu0 %v1278
        %1310 = vmatpush1.bf16.msra.mxu0 %v1277
        %1311 = vmatprep.subr.bf16.mxu0 %v1280
        %1312 = vmatpush1.bf16.msra.mxu0 %v1279
        %1313 = vmatprep.subr.bf16.mxu0 %v1282
        %1314 = vmatpush1.bf16.msra.mxu0 %v1281
        %1315 = vmatprep.subr.bf16.mxu0 0
        %1316 = vmatpush1.bf16.msra.mxu0 0
        %1317 = vmatprep.subr.bf16.mxu0 0
        %1318 = vmatpush1.bf16.msra.mxu0 0
        %1319 = vmatprep.subr.bf16.mxu0 0
        %1320 = vmatpush1.bf16.msra.mxu0 0
        %1321 = vmatprep.subr.bf16.mxu0 0
        %1322 = vmatpush1.bf16.msra.mxu0 0
        %1323 = vmatprep.subr.bf16.mxu0 0
        %1324 = vmatpush1.bf16.msra.mxu0 0
        %1325 = vmatprep.subr.bf16.mxu0 0
        %1326 = vmatpush1.bf16.msra.mxu0 0
        %1327 = vmatprep.subr.bf16.mxu0 0
        %1328 = vmatpush1.bf16.msra.mxu0 0
        %1329 = vmatprep.subr.bf16.mxu0 0
        %1330 = vmatpush1.bf16.msra.mxu0 0
        %1331 = vmatprep.mubr.bf16.mxu0 0
        %1332 = vmatmul.mubr.bf16.gmra.mrb[0].mxu0 %v483
        %v1333 = vpop.f32.mrb[0].mxu0
        %v1334 = vadd.f32 %v508, %v1333
        %v1335 = vpop.f32.mrb[0].mxu0
        %v1336 = vadd.f32 %v512, %v1335
        %v1337 = vpop.f32.mrb[0].mxu0
        %v1338 = vadd.f32 %v508, %v1337
        %v1339 = vpop.f32.mrb[0].mxu0
        %v1340 = vadd.f32 %v512, %v1339
        %1341 = vmatprep.mubr.bf16.mxu0 0
        %1342 = vmatmul.mubr.bf16.gmra.mrb[0].mxu0 %v484
        %v1343 = vpop.f32.mrb[0].mxu0
        %v1344 = vadd.f32 %v508, %v1343
        %v1345 = vpop.f32.mrb[0].mxu0
        %v1346 = vadd.f32 %v512, %v1345
        %v1347 = vpop.f32.mrb[0].mxu0
        %v1348 = vadd.f32 %v508, %v1347
        %v1349 = vpop.f32.mrb[0].mxu0
        %v1350 = vadd.f32 %v512, %v1349
        %1351 = vmatprep.mubr.bf16.mxu0 0
        %1352 = vmatmul.mubr.bf16.gmra.mrb[0].mxu0 %v485
        %v1353 = vpop.f32.mrb[0].mxu0
        %v1354 = vadd.f32 %v508, %v1353
        %v1355 = vpop.f32.mrb[0].mxu0
        %v1356 = vadd.f32 %v512, %v1355
        %v1357 = vpop.f32.mrb[0].mxu0
        %v1358 = vadd.f32 %v508, %v1357
        %v1359 = vpop.f32.mrb[0].mxu0
        %v1360 = vadd.f32 %v512, %v1359
        %1361 = vmatprep.mubr.bf16.mxu0 0
        %1362 = vmatmul.mubr.bf16.gmra.mrb[0].mxu0 %v486
        %v1363 = vpop.f32.mrb[0].mxu0
        %v1364 = vadd.f32 %v508, %v1363
        %v1365 = vpop.f32.mrb[0].mxu0
        %v1366 = vadd.f32 %v512, %v1365
        %v1367 = vpop.f32.mrb[0].mxu0
        %v1368 = vadd.f32 %v508, %v1367
        %v1369 = vpop.f32.mrb[0].mxu0
        %v1370 = vadd.f32 %v512, %v1369
        %1371 = vdwg.mxu0
        %v1388 = vcombine.low %v1334, %v1336
        %v1389 = vcombine.high %v1334, %v1336
        %v1390 = vcombine.low %v1338, %v1340
        %v1391 = vcombine.high %v1338, %v1340
        %v1392 = vcombine.low %v1344, %v1346
        %v1393 = vcombine.high %v1344, %v1346
        %v1394 = vcombine.low %v1348, %v1350
        %v1395 = vcombine.high %v1348, %v1350
        %v1396 = vcombine.low %v1354, %v1356
        %v1397 = vcombine.high %v1354, %v1356
        %v1398 = vcombine.low %v1358, %v1360
        %v1399 = vcombine.high %v1358, %v1360
        %v1400 = vcombine.low %v1364, %v1366
        %v1401 = vcombine.high %v1364, %v1366
        %v1402 = vcombine.low %v1368, %v1370
        %v1403 = vcombine.high %v1368, %v1370
        %s1420 = scalar_lea.vmem %s289, 72 [#allocation8]
        %1421 = vst [vmem:[%s1420] sm:$0xff] %v1388
        %1422 = vst [vmem:[%s1420 + $0x10] sm:$0xff] %v1389
        %1423 = vst [vmem:[%s1420 + $0x20] sm:$0xff] %v1390
        %1424 = vst [vmem:[%s1420 + $0x30] sm:$0xff] %v1391
        %1425 = vst [vmem:[%s1420 + $0x80] sm:$0xff] %v1392
        %1426 = vst [vmem:[%s1420 + $0x90] sm:$0xff] %v1393
        %1427 = vst [vmem:[%s1420 + $0xa0] sm:$0xff] %v1394
        %1428 = vst [vmem:[%s1420 + $0xb0] sm:$0xff] %v1395
        %1429 = vst [vmem:[%s1420 + $0x100] sm:$0xff] %v1396
        %1430 = vst [vmem:[%s1420 + $0x110] sm:$0xff] %v1397
        %1431 = vst [vmem:[%s1420 + $0x120] sm:$0xff] %v1398
        %1432 = vst [vmem:[%s1420 + $0x130] sm:$0xff] %v1399
        %1433 = vst [vmem:[%s1420 + $0x180] sm:$0xff] %v1400
        %1434 = vst [vmem:[%s1420 + $0x190] sm:$0xff] %v1401
        %1435 = vst [vmem:[%s1420 + $0x1a0] sm:$0xff] %v1402
        %1436 = vst [vmem:[%s1420 + $0x1b0] sm:$0xff] %v1403
        %s1437 = sand.u32 %s157, 1
        %s1438 = scalar_lea.sflag [#allocation4], %s1437
        %s1439 = sand.u32 %s157, 1
        %s1440 = smul.addr %s1439, 512
        %s1441 = scalar_lea.vmem [#allocation8], %s1440
        // Predicated region
        $region53: #{tpu_custom_call.1} parent=39 // pred_check
          %p1442 = pneg %p167
        $region54: #{tpu_custom_call.1} parent=39 // pred_check_branch
          %1444 = sbr.rel (%p1442) target = $region56
        $region55: #{tpu_custom_call.1} parent=39 // pred_region
          %s1445 = sadd.s32 %s27, %s28
          %s1446 = smul.u32 4, %s1445
          %s1448 = ssub.s32 8192, 8192
          %1449 = vsyncadd %s1438, %s1448
          %s1450 = smul.addr %s1446, 32
          %s1451 = smul.addr %s1450, 64
          %s1452 = scalar_lea.hbm %s5, %s1451
          %s1453 = sshll.u32 %s1441, 4
          %s1454 = int_to_ptr.vmem [resolvable:$true] %s1453
          %1459 = dma.vmem_to_hbm [thread:$0]  %s1454, 8192, %s1452, %s1438, 128, 128, 8
        $region56: #{tpu_custom_call.1} parent=39 // pred_fallthru
          _
      $region40: #{tpu_custom_call.1} parent=5 // pred_fallthru
        _
      %p1460 = scmp.le.s32.totalorder 2, %s18
      // Predicated region
      $region57: #{tpu_custom_call.1} parent=5 // pred_check
        %p1461 = pneg %p1460
      $region58: #{tpu_custom_call.1} parent=5 // pred_check_branch
        %1463 = sbr.rel (%p1461) target = $region60
      $region59: #{tpu_custom_call.1} parent=5 // pred_region
        %s1464 = ssub.s32 %s18, 2
        // Predicated region
        $region61: #{tpu_custom_call.1} parent=59 // pred_check
          %p1465 = pneg %p173
        $region62: #{tpu_custom_call.1} parent=59 // pred_check_branch
          %1467 = sbr.rel (%p1465) target = $region64
        $region63: #{tpu_custom_call.1} parent=59 // pred_region
          %s1468 = sand.u32 %s158, 1
          %s1469 = scalar_lea.sflag [#allocation4], %s1468
          %s1470 = sand.u32 %s158, 1
          %s1471 = smul.addr %s1470, 512
          %s1472 = scalar_lea.vmem [#allocation8], %s1471
          %1473 = dma.done %s1469, 8192
        $region64: #{tpu_custom_call.1} parent=59 // pred_fallthru
          _
      $region60: #{tpu_custom_call.1} parent=5 // pred_fallthru
        _
    $region6: #{tpu_custom_call.1} parent=1 // loop_footer
      %s22 = sadd.s32 1, %s18
    $region7: #{tpu_custom_call.1} parent=1 // loop_footer_branch
      %17 = sbr.rel target = $region3
    $region8: #{tpu_custom_call.1} parent=1 // loop_exit
      _
    %1474 = vsyncpa [#allocation3], 1
    %s1475 = scalar_lea.sflag [#allocation3], 1
    %1476 = vsyncpa %s1475, 1
    %1477 = vsyncpa [#allocation6], 1
    %1478 = vsyncpa [#allocation4], 1
    %s1479 = scalar_lea.sflag [#allocation4], 1
    %1480 = vsyncpa %s1479, 1

</llo_original>
